<compile_context>
chip_gen: v6e
topology: v6e:2x2x1
jax: 0.10.0
libtpu: 0.0.40
codegen_flags: <defaults>
</compile_context>

<pallas_src>
import functools
import math
import numpy as np

import jax
import jax.numpy as jnp
from jax.experimental import pallas as pl
from jax.experimental.pallas import tpu as pltpu


# ----------------------------------------------------------------------------
# Anchor generation (deterministic host glue, mirrors Anchors.__init__ /
# _get_anchor_boxes of the PyTorch reference)
# ----------------------------------------------------------------------------
ANCHOR_AREAS = [4 * 4, 16 * 16, 64 * 64, 128 * 128]
ASPECT_RATIOS = [1 / 2.0, 1 / 1.0, 2 / 1.0]
SCALE_RATIOS = [1.0, 2.0, 3 / 4.0]
NUM_ANCHORS = len(ASPECT_RATIOS) * len(SCALE_RATIOS)   # 9

# anchor-table rows (host precomputed static per-anchor quantities)
_A_CX, _A_CY, _A_IW, _A_IH, _A_X1, _A_Y1, _A_X2, _A_Y2, _A_AREA = range(9)
_A_ROWS = 9
# gt-table feature columns
_G_CX, _G_CY, _G_W, _G_H, _G_X1, _G_Y1, _G_X2, _G_Y2, _G_AREA, _G_LAB, _G_LEN = range(11)
_G_COLS = 11


def _get_anchor_wh():
    anchor_wh = []
    for s in ANCHOR_AREAS:
        for ar in ASPECT_RATIOS:
            h = math.sqrt(s / ar)
            w = ar * h
            for sr in SCALE_RATIOS:
                anchor_wh.append([w * sr, h * sr])
    return np.array(anchor_wh, np.float32).reshape(len(ANCHOR_AREAS), -1, 2)


def _get_anchor_boxes(input_size):
    """Returns (A, 4) xywh anchors, same layout as the PyTorch reference."""
    input_size = np.array(input_size, np.float32)
    anchor_wh = _get_anchor_wh()
    num_fms = len(ANCHOR_AREAS)
    boxes = []
    for i in range(num_fms):
        fm_size = np.ceil(input_size / (2.0 ** (i + 2)))
        grid_size = input_size / fm_size
        fm_w, fm_h = int(fm_size[0]), int(fm_size[1])
        xs = np.arange(fm_w, dtype=np.float32)
        ys = np.arange(fm_h, dtype=np.float32)
        xx, yy = np.meshgrid(xs, ys)                       # x fastest (torchcv meshgrid)
        xy = np.stack([xx, yy], axis=-1).reshape(-1, 2)
        xy = (xy + 0.5) * grid_size
        xy = np.broadcast_to(xy.reshape(fm_h, fm_w, 1, 2),
                             (fm_h, fm_w, NUM_ANCHORS, 2))
        wh = np.broadcast_to(anchor_wh[i].reshape(1, 1, NUM_ANCHORS, 2),
                             (fm_h, fm_w, NUM_ANCHORS, 2))
        box = np.concatenate([xy, wh], axis=3).reshape(-1, 4)
        boxes.append(box.astype(np.float32))
    return np.concatenate(boxes, 0)


def _build_anchor_table(input_size):
    """Host-precomputed (9, A_pad) f32 table: cx, cy, 1/w, 1/h, x1, y1, x2, y2, area."""
    anchor_boxes = _get_anchor_boxes(input_size)           # (A, 4) xywh, f32
    A = anchor_boxes.shape[0]
    A_pad = ((A + 127) // 128) * 128
    pad = np.zeros((A_pad - A, 4), np.float32)
    pad[:, 2:] = 1.0                                       # w=h=1 for padded anchors
    ab = np.concatenate([anchor_boxes, pad], 0)
    cx, cy, w, h = ab[:, 0], ab[:, 1], ab[:, 2], ab[:, 3]
    x1 = cx - w * 0.5
    y1 = cy - h * 0.5
    x2 = cx + w * 0.5
    y2 = cy + h * 0.5
    area = (x2 - x1 + 1.0) * (y2 - y1 + 1.0)
    tab = np.stack([cx, cy, 1.0 / w, 1.0 / h, x1, y1, x2, y2, area],
                   axis=0).astype(np.float32)              # (9, A_pad)
    return tab, A, A_pad


# ----------------------------------------------------------------------------
# Fused kernel: IoU + reductions + force-best-anchor override + gather + encode
# Layout: anchors on lanes, GTs / coords on sublanes.
# ----------------------------------------------------------------------------
def anchors_fused_kernel(anch_ref, gt_ref, loc_ref, cls_ref, *, num_real_anchors):
    anch = anch_ref[...]                                   # (9, A_pad)
    gt = gt_ref[0]                                         # (N, 11)
    a_pad = anch.shape[1]
    n = gt.shape[0]

    # ---- IoU matrix (N, A_pad), torchcv "+1" xywh convention ----
    a_x1 = anch[_A_X1:_A_X1 + 1, :]                        # (1, A_pad)
    a_y1 = anch[_A_Y1:_A_Y1 + 1, :]
    a_x2 = anch[_A_X2:_A_X2 + 1, :]
    a_y2 = anch[_A_Y2:_A_Y2 + 1, :]
    a_area = anch[_A_AREA:_A_AREA + 1, :]

    g_x1 = gt[:, _G_X1:_G_X1 + 1]                          # (N, 1)
    g_y1 = gt[:, _G_Y1:_G_Y1 + 1]
    g_x2 = gt[:, _G_X2:_G_X2 + 1]
    g_y2 = gt[:, _G_Y2:_G_Y2 + 1]
    g_area = gt[:, _G_AREA:_G_AREA + 1]

    iw = jnp.maximum(jnp.minimum(a_x2, g_x2) - jnp.maximum(a_x1, g_x1) + 1.0, 0.0)
    ih = jnp.maximum(jnp.minimum(a_y2, g_y2) - jnp.maximum(a_y1, g_y1) + 1.0, 0.0)
    inter = iw * ih                                        # (N, A_pad)
    # exact divide kept: IoU is compared against hard 0.4/0.5 thresholds
    iou = inter / (a_area + g_area - inter)                # (N, A_pad)

    lane = jax.lax.broadcasted_iota(jnp.int32, (n, a_pad), 1)
    row = jax.lax.broadcasted_iota(jnp.int32, (n, a_pad), 0)
    # mask padded anchor lanes so they never win the per-GT argmax
    iou = jnp.where(lane < num_real_anchors, iou, -1.0)

    # ---- per-anchor max/argmax over GTs (sublane reduce) ----
    max_ious = jnp.max(iou, axis=0, keepdims=True)                           # (1, A_pad)
    max_ids = jnp.min(jnp.where(iou == max_ious, row, n),
                      axis=0, keepdims=True)                                 # (1, A_pad)

    # ---- per-GT max/argmax over anchors (lane reduce) ----
    gt_max = jnp.max(iou, axis=1, keepdims=True)                             # (N, 1)
    gt_max_ids = jnp.min(jnp.where(iou == gt_max, lane, a_pad),
                         axis=1, keepdims=True)                              # (N, 1)

    # ---- force best anchor of the first gt_len GTs (vectorized; last GT wins,
    #      matching the sequential torch writes) ----
    gt_len = gt[:, _G_LEN:_G_LEN + 1].astype(jnp.int32)                      # (N, 1)
    match = (lane == gt_max_ids) & (row < gt_len)                            # (N, A_pad)
    winner = jnp.max(jnp.where(match, row, -1), axis=0, keepdims=True)       # (1, A_pad)
    forced = winner >= 0
    max_ids = jnp.where(forced, winner, max_ids)
    max_ious = jnp.where(forced, 1.0, max_ious)

    # ---- gather matched GT features: mask + sublane sum (exactly one hit/lane) ----
    onehot = row == max_ids                                                  # (N, A_pad)

    def gather(col):                                                         # col: (N, 1)
        return jnp.sum(jnp.where(onehot, col, 0.0), axis=0, keepdims=True)   # (1, A_pad)

    g_cx = gather(gt[:, _G_CX:_G_CX + 1])
    g_cy = gather(gt[:, _G_CY:_G_CY + 1])
    g_w = gather(gt[:, _G_W:_G_W + 1])
    g_h = gather(gt[:, _G_H:_G_H + 1])
    g_lab = gather(gt[:, _G_LAB:_G_LAB + 1])

    # ---- loc encoding: row-wise lane-dense stores, divides replaced by multiplies ----
    inv_w = anch[_A_IW:_A_IW + 1, :]
    inv_h = anch[_A_IH:_A_IH + 1, :]
    loc_ref[0, 0:1, :] = (g_cx - anch[_A_CX:_A_CX + 1, :]) * inv_w
    loc_ref[0, 1:2, :] = (g_cy - anch[_A_CY:_A_CY + 1, :]) * inv_h
    loc_ref[0, 2:3, :] = jnp.log(g_w * inv_w)
    loc_ref[0, 3:4, :] = jnp.log(g_h * inv_h)

    # ---- class targets with 0.4/0.5 thresholds ----
    cls = jnp.where(max_ious < 0.5, 0.0, g_lab)
    cls = jnp.where((max_ious > 0.4) & (max_ious < 0.5), -1.0, cls)
    cls_ref[0, 0:1, :] = cls


# ----------------------------------------------------------------------------
# Forward wrapper (matches Anchors.forward semantics)
# ----------------------------------------------------------------------------
def anchors_forward(labels, boxes, input_size):
    """labels: (B, N) float32, boxes: (B, N, 4) xyxy float32, input_size: (w, h).

    Returns (cls_targets (B, A) float32, loc_targets (B, A, 4) float32)."""
    B, N = labels.shape
    labels = labels.astype(jnp.float32)
    boxes = boxes.astype(jnp.float32)

    anch_tab_np, A, A_pad = _build_anchor_table(input_size)
    anch_tab = jnp.asarray(anch_tab_np)                    # (9, A_pad)

    # change_box_order 'xyxy2xywh' (torchcv convention, sizes include +1) plus
    # precomputed corners / area / label / gt_len as a (B, N, 11) GT table.
    xy1 = boxes[..., :2]
    xy2 = boxes[..., 2:]
    cxcy = (xy1 + xy2) / 2.0
    wh = xy2 - xy1 + 1.0
    bx1y1 = cxcy - wh * 0.5
    bx2y2 = cxcy + wh * 0.5
    area = ((bx2y2[..., 0:1] - bx1y1[..., 0:1] + 1.0) *
            (bx2y2[..., 1:2] - bx1y1[..., 1:2] + 1.0))
    gt_len = labels.astype(jnp.int32).sum(axis=1).astype(jnp.float32)        # (B,)
    gt_len = jnp.broadcast_to(gt_len[:, None, None], (B, N, 1))
    gt_tab = jnp.concatenate(
        [cxcy, wh, bx1y1, bx2y2, area, labels[..., None], gt_len], axis=-1)  # (B, N, 11)

    kernel = functools.partial(anchors_fused_kernel, num_real_anchors=A)
    loc, cls = pl.pallas_call(
        kernel,
        out_shape=(
            jax.ShapeDtypeStruct((B, 4, A_pad), jnp.float32),
            jax.ShapeDtypeStruct((B, 1, A_pad), jnp.float32),
        ),
        grid=(B,),
        in_specs=[
            pl.BlockSpec((_A_ROWS, A_pad), lambda b: (0, 0)),
            pl.BlockSpec((1, N, _G_COLS), lambda b: (b, 0, 0)),
        ],
        out_specs=(
            pl.BlockSpec((1, 4, A_pad), lambda b: (b, 0, 0)),
            pl.BlockSpec((1, 1, A_pad), lambda b: (b, 0, 0)),
        ),
        compiler_params=pltpu.CompilerParams(
            dimension_semantics=("parallel",)),            # v7x: shard batch over 2 TCs
    )(anch_tab, gt_tab)

    cls_targets = cls[:, 0, :A]                            # (B, A)
    loc_targets = jnp.transpose(loc[:, :, :A], (0, 2, 1))  # (B, A, 4)
    # TODO(synk): PyTorch returns cls_targets in the labels' integer dtype (Long);
    # here labels/cls are carried as float32.
    return cls_targets, loc_targets


# ----------------------------------------------------------------------------
# Pure-numpy reference (mirrors the PyTorch forward) for correctness checking
# ----------------------------------------------------------------------------
def _reference_forward(labels_np, boxes_np, input_size):
    anchor = _get_anchor_boxes(input_size)                 # (A, 4) xywh f32
    A = anchor.shape[0]
    B, N = labels_np.shape
    a = boxes_np[..., :2]
    b2 = boxes_np[..., 2:]
    gt = np.concatenate([(a + b2) / 2.0, b2 - a + 1.0], -1).astype(np.float32)
    ax1 = anchor[:, :2] - anchor[:, 2:] * 0.5
    ax2 = anchor[:, :2] + anchor[:, 2:] * 0.5
    area_a = (ax2[:, 0] - ax1[:, 0] + 1.0) * (ax2[:, 1] - ax1[:, 1] + 1.0)
    cls_out = np.zeros((B, A), np.float32)
    loc_out = np.zeros((B, A, 4), np.float32)
    for b in range(B):
        gx1 = gt[b, :, :2] - gt[b, :, 2:] * 0.5
        gx2 = gt[b, :, :2] + gt[b, :, 2:] * 0.5
        lt = np.maximum(ax1[:, None, :], gx1[None, :, :])
        rb = np.minimum(ax2[:, None, :], gx2[None, :, :])
        wh = np.clip(rb - lt + 1.0, 0.0, None)
        inter = wh[..., 0] * wh[..., 1]                    # (A, N)
        area_g = (gx2[:, 0] - gx1[:, 0] + 1.0) * (gx2[:, 1] - gx1[:, 1] + 1.0)
        iou = inter / (area_a[:, None] + area_g[None, :] - inter)
        max_ious = iou.max(1)
        max_ids = iou.argmax(1)
        gt_max_ids = iou.argmax(0)
        L = int(labels_np[b].astype(np.int64).sum())
        for j in range(L):
            max_ids[gt_max_ids[j]] = j
            max_ious[gt_max_ids[j]] = 1.0
        g = gt[b][max_ids]
        loc_xy = (g[:, :2] - anchor[:, :2]) / anchor[:, 2:]
        loc_wh = np.log(g[:, 2:] / anchor[:, 2:])
        loc_out[b] = np.concatenate([loc_xy, loc_wh], 1)
        cls = labels_np[b][max_ids].copy()
        cls[max_ious < 0.5] = 0.0
        cls[(max_ious > 0.4) & (max_ious < 0.5)] = -1.0
        cls_out[b] = cls
    return cls_out, loc_out


if __name__ == "__main__":
    key = jax.random.PRNGKey(0)
    B, N = 2, 8
    input_size = (32.0, 32.0)

    k1, k2, k3 = jax.random.split(key, 3)
    xy1 = jax.random.uniform(k1, (B, N, 2), minval=0.0, maxval=20.0)
    wh = jax.random.uniform(k2, (B, N, 2), minval=2.0, maxval=10.0)
    boxes = jnp.concatenate([xy1, xy1 + wh], axis=-1).astype(jnp.float32)   # xyxy
    labels = (jax.random.uniform(k3, (B, N)) > 0.3).astype(jnp.float32)

    cls_t, loc_t = anchors_forward(labels, boxes, input_size)
    jax.block_until_ready((cls_t, loc_t))

    num_anchors_total = 765  # (8*8 + 4*4 + 2*2 + 1*1) * 9 for a 32x32 input
    assert cls_t.shape == (B, num_anchors_total), cls_t.shape
    assert loc_t.shape == (B, num_anchors_total, 4), loc_t.shape
    assert bool(jnp.all(jnp.isfinite(loc_t)))
    assert bool(jnp.all(jnp.isfinite(cls_t)))

    cls_r, loc_r = _reference_forward(np.asarray(labels), np.asarray(boxes), input_size)
    np.testing.assert_array_equal(np.asarray(cls_t), cls_r)
    np.testing.assert_allclose(np.asarray(loc_t), loc_r, rtol=1e-4, atol=1e-4)

    print("KERNEL_OK")
</pallas_src>

<mosaic_0001>
module attributes {stable_mosaic.version = 11 : i64} {
  func.func @anchors_fused_kernel(%arg0: i32, %arg1: memref<9x768xf32, #tpu.memory_space<vmem>>, %arg2: memref<1x8x11xf32, #tpu.memory_space<vmem>>, %arg3: memref<1x4x768xf32, #tpu.memory_space<vmem>>, %arg4: memref<1x1x768xf32, #tpu.memory_space<vmem>>) attributes {dimension_semantics = [#tpu.dimension_semantics<parallel>], iteration_bounds = array<i64: 2>, scalar_prefetch = 0 : i64, scratch_operands = 0 : i64, tpu.core_type = #tpu.core_type<tc>, window_params = [{pipeline_mode = #tpu.pipeline_mode<synchronous>, transform_indices = @transform_0, window_bounds = array<i64: 9, 768>}, {transform_indices = @transform_1, window_bounds = array<i64: 1, 8, 11>}, {transform_indices = @transform_2, window_bounds = array<i64: 1, 4, 768>}, {transform_indices = @transform_3, window_bounds = array<i64: 1, 1, 768>}]} {
    %c0 = arith.constant 0 : index
    %c0_0 = arith.constant 0 : index
    %0 = vector.load %arg1[%c0, %c0_0] : memref<9x768xf32, #tpu.memory_space<vmem>>, vector<9x768xf32>
    %c0_1 = arith.constant 0 : index
    %c0_2 = arith.constant 0 : index
    %c0_3 = arith.constant 0 : index
    %1 = vector.load %arg2[%c0_1, %c0_2, %c0_3] : memref<1x8x11xf32, #tpu.memory_space<vmem>>, vector<1x8x11xf32>
    %2 = vector.shape_cast %1 : vector<1x8x11xf32> to vector<8x11xf32>
    %3 = vector.extract_strided_slice %0 {offsets = [4, 0], sizes = [1, 768], strides = [1, 1]} : vector<9x768xf32> to vector<1x768xf32>
    %4 = vector.extract_strided_slice %0 {offsets = [5, 0], sizes = [1, 768], strides = [1, 1]} : vector<9x768xf32> to vector<1x768xf32>
    %5 = vector.extract_strided_slice %0 {offsets = [6, 0], sizes = [1, 768], strides = [1, 1]} : vector<9x768xf32> to vector<1x768xf32>
    %6 = vector.extract_strided_slice %0 {offsets = [7, 0], sizes = [1, 768], strides = [1, 1]} : vector<9x768xf32> to vector<1x768xf32>
    %7 = vector.extract_strided_slice %0 {offsets = [8, 0], sizes = [1, 768], strides = [1, 1]} : vector<9x768xf32> to vector<1x768xf32>
    %8 = vector.extract_strided_slice %2 {offsets = [0, 4], sizes = [8, 1], strides = [1, 1]} : vector<8x11xf32> to vector<8x1xf32>
    %9 = vector.extract_strided_slice %2 {offsets = [0, 5], sizes = [8, 1], strides = [1, 1]} : vector<8x11xf32> to vector<8x1xf32>
    %10 = vector.extract_strided_slice %2 {offsets = [0, 6], sizes = [8, 1], strides = [1, 1]} : vector<8x11xf32> to vector<8x1xf32>
    %11 = vector.extract_strided_slice %2 {offsets = [0, 7], sizes = [8, 1], strides = [1, 1]} : vector<8x11xf32> to vector<8x1xf32>
    %12 = vector.extract_strided_slice %2 {offsets = [0, 8], sizes = [8, 1], strides = [1, 1]} : vector<8x11xf32> to vector<8x1xf32>
    %13 = vector.broadcast %5 : vector<1x768xf32> to vector<8x768xf32>
    %14 = vector.broadcast %10 : vector<8x1xf32> to vector<8x768xf32>
    %15 = arith.minimumf %13, %14 : vector<8x768xf32>
    %16 = vector.broadcast %3 : vector<1x768xf32> to vector<8x768xf32>
    %17 = vector.broadcast %8 : vector<8x1xf32> to vector<8x768xf32>
    %18 = arith.maximumf %16, %17 : vector<8x768xf32>
    %19 = arith.subf %15, %18 : vector<8x768xf32>
    %cst = arith.constant 1.000000e+00 : f32
    %20 = vector.broadcast %cst : f32 to vector<8x768xf32>
    %21 = arith.addf %19, %20 : vector<8x768xf32>
    %cst_4 = arith.constant 0.000000e+00 : f32
    %22 = vector.broadcast %cst_4 : f32 to vector<8x768xf32>
    %23 = arith.maximumf %21, %22 : vector<8x768xf32>
    %24 = vector.broadcast %6 : vector<1x768xf32> to vector<8x768xf32>
    %25 = vector.broadcast %11 : vector<8x1xf32> to vector<8x768xf32>
    %26 = arith.minimumf %24, %25 : vector<8x768xf32>
    %27 = vector.broadcast %4 : vector<1x768xf32> to vector<8x768xf32>
    %28 = vector.broadcast %9 : vector<8x1xf32> to vector<8x768xf32>
    %29 = arith.maximumf %27, %28 : vector<8x768xf32>
    %30 = arith.subf %26, %29 : vector<8x768xf32>
    %cst_5 = arith.constant 1.000000e+00 : f32
    %31 = vector.broadcast %cst_5 : f32 to vector<8x768xf32>
    %32 = arith.addf %30, %31 : vector<8x768xf32>
    %cst_6 = arith.constant 0.000000e+00 : f32
    %33 = vector.broadcast %cst_6 : f32 to vector<8x768xf32>
    %34 = arith.maximumf %32, %33 : vector<8x768xf32>
    %35 = arith.mulf %23, %34 : vector<8x768xf32>
    %36 = vector.broadcast %7 : vector<1x768xf32> to vector<8x768xf32>
    %37 = vector.broadcast %12 : vector<8x1xf32> to vector<8x768xf32>
    %38 = arith.addf %36, %37 : vector<8x768xf32>
    %39 = arith.subf %38, %35 : vector<8x768xf32>
    %40 = arith.divf %35, %39 : vector<8x768xf32>
    %41 = tpu.iota {dimensions = array<i32: 1>} : vector<8x768xi32>
    %42 = tpu.iota {dimensions = array<i32: 0>} : vector<8x768xi32>
    %c765_i32 = arith.constant 765 : i32
    %43 = vector.broadcast %c765_i32 : i32 to vector<8x768xi32>
    %44 = arith.cmpi slt, %41, %43 : vector<8x768xi32>
    %cst_7 = arith.constant -1.000000e+00 : f32
    %45 = vector.broadcast %cst_7 : f32 to vector<8x768xf32>
    %46 = arith.select %44, %40, %45 : vector<8x768xi1>, vector<8x768xf32>
    %cst_8 = arith.constant dense<0xFF800000> : vector<768xf32>
    %47 = vector.multi_reduction <maximumf>, %46, %cst_8 [0] : vector<8x768xf32> to vector<768xf32>
    %48 = vector.shape_cast %47 : vector<768xf32> to vector<1x768xf32>
    %49 = vector.broadcast %48 : vector<1x768xf32> to vector<8x768xf32>
    %50 = arith.cmpf oeq, %46, %49 : vector<8x768xf32>
    %c8_i32 = arith.constant 8 : i32
    %51 = vector.broadcast %c8_i32 : i32 to vector<8x768xi32>
    %52 = arith.select %50, %42, %51 : vector<8x768xi1>, vector<8x768xi32>
    %cst_9 = arith.constant dense<2147483647> : vector<768xi32>
    %53 = vector.multi_reduction <minsi>, %52, %cst_9 [0] : vector<8x768xi32> to vector<768xi32>
    %54 = vector.shape_cast %53 : vector<768xi32> to vector<1x768xi32>
    %cst_10 = arith.constant dense<0xFF800000> : vector<8xf32>
    %55 = vector.multi_reduction <maximumf>, %46, %cst_10 [1] : vector<8x768xf32> to vector<8xf32>
    %56 = vector.shape_cast %55 : vector<8xf32> to vector<8x1xf32>
    %57 = vector.broadcast %56 : vector<8x1xf32> to vector<8x768xf32>
    %58 = arith.cmpf oeq, %46, %57 : vector<8x768xf32>
    %c768_i32 = arith.constant 768 : i32
    %59 = vector.broadcast %c768_i32 : i32 to vector<8x768xi32>
    %60 = arith.select %58, %41, %59 : vector<8x768xi1>, vector<8x768xi32>
    %cst_11 = arith.constant dense<2147483647> : vector<8xi32>
    %61 = vector.multi_reduction <minsi>, %60, %cst_11 [1] : vector<8x768xi32> to vector<8xi32>
    %62 = vector.shape_cast %61 : vector<8xi32> to vector<8x1xi32>
    %63 = vector.extract_strided_slice %2 {offsets = [0, 10], sizes = [8, 1], strides = [1, 1]} : vector<8x11xf32> to vector<8x1xf32>
    %64 = arith.fptosi %63 : vector<8x1xf32> to vector<8x1xi32>
    %65 = vector.broadcast %62 : vector<8x1xi32> to vector<8x768xi32>
    %66 = arith.cmpi eq, %41, %65 : vector<8x768xi32>
    %67 = vector.broadcast %64 : vector<8x1xi32> to vector<8x768xi32>
    %68 = arith.cmpi slt, %42, %67 : vector<8x768xi32>
    %69 = arith.andi %66, %68 : vector<8x768xi1>
    %c-1_i32 = arith.constant -1 : i32
    %70 = vector.broadcast %c-1_i32 : i32 to vector<8x768xi32>
    %71 = arith.select %69, %42, %70 : vector<8x768xi1>, vector<8x768xi32>
    %cst_12 = arith.constant dense<-2147483648> : vector<768xi32>
    %72 = vector.multi_reduction <maxsi>, %71, %cst_12 [0] : vector<8x768xi32> to vector<768xi32>
    %73 = vector.shape_cast %72 : vector<768xi32> to vector<1x768xi32>
    %c0_i32 = arith.constant 0 : i32
    %74 = vector.broadcast %c0_i32 : i32 to vector<1x768xi32>
    %75 = arith.cmpi sge, %73, %74 : vector<1x768xi32>
    %76 = arith.select %75, %73, %54 : vector<1x768xi1>, vector<1x768xi32>
    %cst_13 = arith.constant 1.000000e+00 : f32
    %77 = vector.broadcast %cst_13 : f32 to vector<1x768xf32>
    %78 = arith.select %75, %77, %48 : vector<1x768xi1>, vector<1x768xf32>
    %79 = vector.broadcast %76 : vector<1x768xi32> to vector<8x768xi32>
    %80 = arith.cmpi eq, %42, %79 : vector<8x768xi32>
    %81 = vector.extract_strided_slice %2 {offsets = [0, 0], sizes = [8, 1], strides = [1, 1]} : vector<8x11xf32> to vector<8x1xf32>
    %cst_14 = arith.constant 0.000000e+00 : f32
    %82 = vector.shape_cast %81 : vector<8x1xf32> to vector<8x1xf32>
    %83 = vector.broadcast %82 : vector<8x1xf32> to vector<8x768xf32>
    %84 = vector.broadcast %cst_14 : f32 to vector<8x768xf32>
    %85 = arith.select %80, %83, %84 : vector<8x768xi1>, vector<8x768xf32>
    %cst_15 = arith.constant dense<0.000000e+00> : vector<768xf32>
    %86 = vector.multi_reduction <add>, %85, %cst_15 [0] : vector<8x768xf32> to vector<768xf32>
    %87 = vector.shape_cast %86 : vector<768xf32> to vector<1x768xf32>
    %88 = vector.extract_strided_slice %2 {offsets = [0, 1], sizes = [8, 1], strides = [1, 1]} : vector<8x11xf32> to vector<8x1xf32>
    %cst_16 = arith.constant 0.000000e+00 : f32
    %89 = vector.shape_cast %88 : vector<8x1xf32> to vector<8x1xf32>
    %90 = vector.broadcast %89 : vector<8x1xf32> to vector<8x768xf32>
    %91 = vector.broadcast %cst_16 : f32 to vector<8x768xf32>
    %92 = arith.select %80, %90, %91 : vector<8x768xi1>, vector<8x768xf32>
    %cst_17 = arith.constant dense<0.000000e+00> : vector<768xf32>
    %93 = vector.multi_reduction <add>, %92, %cst_17 [0] : vector<8x768xf32> to vector<768xf32>
    %94 = vector.shape_cast %93 : vector<768xf32> to vector<1x768xf32>
    %95 = vector.extract_strided_slice %2 {offsets = [0, 2], sizes = [8, 1], strides = [1, 1]} : vector<8x11xf32> to vector<8x1xf32>
    %cst_18 = arith.constant 0.000000e+00 : f32
    %96 = vector.shape_cast %95 : vector<8x1xf32> to vector<8x1xf32>
    %97 = vector.broadcast %96 : vector<8x1xf32> to vector<8x768xf32>
    %98 = vector.broadcast %cst_18 : f32 to vector<8x768xf32>
    %99 = arith.select %80, %97, %98 : vector<8x768xi1>, vector<8x768xf32>
    %cst_19 = arith.constant dense<0.000000e+00> : vector<768xf32>
    %100 = vector.multi_reduction <add>, %99, %cst_19 [0] : vector<8x768xf32> to vector<768xf32>
    %101 = vector.shape_cast %100 : vector<768xf32> to vector<1x768xf32>
    %102 = vector.extract_strided_slice %2 {offsets = [0, 3], sizes = [8, 1], strides = [1, 1]} : vector<8x11xf32> to vector<8x1xf32>
    %cst_20 = arith.constant 0.000000e+00 : f32
    %103 = vector.shape_cast %102 : vector<8x1xf32> to vector<8x1xf32>
    %104 = vector.broadcast %103 : vector<8x1xf32> to vector<8x768xf32>
    %105 = vector.broadcast %cst_20 : f32 to vector<8x768xf32>
    %106 = arith.select %80, %104, %105 : vector<8x768xi1>, vector<8x768xf32>
    %cst_21 = arith.constant dense<0.000000e+00> : vector<768xf32>
    %107 = vector.multi_reduction <add>, %106, %cst_21 [0] : vector<8x768xf32> to vector<768xf32>
    %108 = vector.shape_cast %107 : vector<768xf32> to vector<1x768xf32>
    %109 = vector.extract_strided_slice %2 {offsets = [0, 9], sizes = [8, 1], strides = [1, 1]} : vector<8x11xf32> to vector<8x1xf32>
    %cst_22 = arith.constant 0.000000e+00 : f32
    %110 = vector.shape_cast %109 : vector<8x1xf32> to vector<8x1xf32>
    %111 = vector.broadcast %110 : vector<8x1xf32> to vector<8x768xf32>
    %112 = vector.broadcast %cst_22 : f32 to vector<8x768xf32>
    %113 = arith.select %80, %111, %112 : vector<8x768xi1>, vector<8x768xf32>
    %cst_23 = arith.constant dense<0.000000e+00> : vector<768xf32>
    %114 = vector.multi_reduction <add>, %113, %cst_23 [0] : vector<8x768xf32> to vector<768xf32>
    %115 = vector.shape_cast %114 : vector<768xf32> to vector<1x768xf32>
    %116 = vector.extract_strided_slice %0 {offsets = [2, 0], sizes = [1, 768], strides = [1, 1]} : vector<9x768xf32> to vector<1x768xf32>
    %117 = vector.extract_strided_slice %0 {offsets = [3, 0], sizes = [1, 768], strides = [1, 1]} : vector<9x768xf32> to vector<1x768xf32>
    %118 = vector.extract_strided_slice %0 {offsets = [0, 0], sizes = [1, 768], strides = [1, 1]} : vector<9x768xf32> to vector<1x768xf32>
    %119 = arith.subf %87, %118 : vector<1x768xf32>
    %120 = arith.mulf %119, %116 : vector<1x768xf32>
    %c0_24 = arith.constant 0 : index
    %c0_25 = arith.constant 0 : index
    %c0_26 = arith.constant 0 : index
    %121 = vector.load %arg3[%c0_24, %c0_25, %c0_26] : memref<1x4x768xf32, #tpu.memory_space<vmem>>, vector<1x1x768xf32>
    %122 = vector.shape_cast %121 : vector<1x1x768xf32> to vector<1x768xf32>
    %123 = vector.shape_cast %120 : vector<1x768xf32> to vector<1x1x768xf32>
    tpu.vector_store %arg3[%c0_24, %c0_25, %c0_26], %123 {strides = array<i32>} : memref<1x4x768xf32, #tpu.memory_space<vmem>>, vector<1x1x768xf32>,
    %124 = vector.extract_strided_slice %0 {offsets = [1, 0], sizes = [1, 768], strides = [1, 1]} : vector<9x768xf32> to vector<1x768xf32>
    %125 = arith.subf %94, %124 : vector<1x768xf32>
    %126 = arith.mulf %125, %117 : vector<1x768xf32>
    %c0_27 = arith.constant 0 : index
    %c1 = arith.constant 1 : index
    %c0_28 = arith.constant 0 : index
    %127 = vector.load %arg3[%c0_27, %c1, %c0_28] : memref<1x4x768xf32, #tpu.memory_space<vmem>>, vector<1x1x768xf32>
    %128 = vector.shape_cast %127 : vector<1x1x768xf32> to vector<1x768xf32>
    %129 = vector.shape_cast %126 : vector<1x768xf32> to vector<1x1x768xf32>
    tpu.vector_store %arg3[%c0_27, %c1, %c0_28], %129 {strides = array<i32>} : memref<1x4x768xf32, #tpu.memory_space<vmem>>, vector<1x1x768xf32>,
    %130 = arith.mulf %101, %116 : vector<1x768xf32>
    %131 = math.log %130 : vector<1x768xf32>
    %c0_29 = arith.constant 0 : index
    %c2 = arith.constant 2 : index
    %c0_30 = arith.constant 0 : index
    %132 = vector.load %arg3[%c0_29, %c2, %c0_30] : memref<1x4x768xf32, #tpu.memory_space<vmem>>, vector<1x1x768xf32>
    %133 = vector.shape_cast %132 : vector<1x1x768xf32> to vector<1x768xf32>
    %134 = vector.shape_cast %131 : vector<1x768xf32> to vector<1x1x768xf32>
    tpu.vector_store %arg3[%c0_29, %c2, %c0_30], %134 {strides = array<i32>} : memref<1x4x768xf32, #tpu.memory_space<vmem>>, vector<1x1x768xf32>,
    %135 = arith.mulf %108, %117 : vector<1x768xf32>
    %136 = math.log %135 : vector<1x768xf32>
    %c0_31 = arith.constant 0 : index
    %c3 = arith.constant 3 : index
    %c0_32 = arith.constant 0 : index
    %137 = vector.load %arg3[%c0_31, %c3, %c0_32] : memref<1x4x768xf32, #tpu.memory_space<vmem>>, vector<1x1x768xf32>
    %138 = vector.shape_cast %137 : vector<1x1x768xf32> to vector<1x768xf32>
    %139 = vector.shape_cast %136 : vector<1x768xf32> to vector<1x1x768xf32>
    tpu.vector_store %arg3[%c0_31, %c3, %c0_32], %139 {strides = array<i32>} : memref<1x4x768xf32, #tpu.memory_space<vmem>>, vector<1x1x768xf32>,
    %cst_33 = arith.constant 5.000000e-01 : f32
    %140 = vector.broadcast %cst_33 : f32 to vector<1x768xf32>
    %141 = arith.cmpf olt, %78, %140 : vector<1x768xf32>
    %cst_34 = arith.constant 0.000000e+00 : f32
    %142 = vector.broadcast %cst_34 : f32 to vector<1x768xf32>
    %143 = arith.select %141, %142, %115 : vector<1x768xi1>, vector<1x768xf32>
    %cst_35 = arith.constant 4.000000e-01 : f32
    %144 = vector.broadcast %cst_35 : f32 to vector<1x768xf32>
    %145 = arith.cmpf ogt, %78, %144 : vector<1x768xf32>
    %cst_36 = arith.constant 5.000000e-01 : f32
    %146 = vector.broadcast %cst_36 : f32 to vector<1x768xf32>
    %147 = arith.cmpf olt, %78, %146 : vector<1x768xf32>
    %148 = arith.andi %145, %147 : vector<1x768xi1>
    %cst_37 = arith.constant -1.000000e+00 : f32
    %149 = vector.broadcast %cst_37 : f32 to vector<1x768xf32>
    %150 = arith.select %148, %149, %143 : vector<1x768xi1>, vector<1x768xf32>
    %c0_38 = arith.constant 0 : index
    %c0_39 = arith.constant 0 : index
    %c0_40 = arith.constant 0 : index
    %151 = vector.load %arg4[%c0_38, %c0_39, %c0_40] : memref<1x1x768xf32, #tpu.memory_space<vmem>>, vector<1x1x768xf32>
    %152 = vector.shape_cast %151 : vector<1x1x768xf32> to vector<1x768xf32>
    %153 = vector.shape_cast %150 : vector<1x768xf32> to vector<1x1x768xf32>
    tpu.vector_store %arg4[%c0_38, %c0_39, %c0_40], %153 {strides = array<i32>} : memref<1x1x768xf32, #tpu.memory_space<vmem>>, vector<1x1x768xf32>,
    return
  }
  func.func @transform_0(%arg0: i32) -> (i32, i32) {
    %c0_i32 = arith.constant 0 : i32
    %c0_i32_0 = arith.constant 0 : i32
    %c0_i32_1 = arith.constant 0 : i32
    return %c0_i32, %c0_i32_0 : i32, i32
  }
  func.func @transform_1(%arg0: i32) -> (i32, i32, i32) {
    %c0_i32 = arith.constant 0 : i32
    %c0_i32_0 = arith.constant 0 : i32
    %c0_i32_1 = arith.constant 0 : i32
    return %arg0, %c0_i32, %c0_i32_0 : i32, i32, i32
  }
  func.func @transform_2(%arg0: i32) -> (i32, i32, i32) {
    %c0_i32 = arith.constant 0 : i32
    %c0_i32_0 = arith.constant 0 : i32
    %c0_i32_1 = arith.constant 0 : i32
    return %arg0, %c0_i32, %c0_i32_0 : i32, i32, i32
  }
  func.func @transform_3(%arg0: i32) -> (i32, i32, i32) {
    %c0_i32 = arith.constant 0 : i32
    %c0_i32_0 = arith.constant 0 : i32
    %c0_i32_1 = arith.constant 0 : i32
    return %arg0, %c0_i32, %c0_i32_0 : i32, i32, i32
  }
}

</mosaic_0001>

<llo_original>
// kernel: tpu_custom_call.1
$region0: #{tpu_custom_call.1}
  #allocation0 [shape = 'u32[]', space=smem, size = 0x4, offset = 0x4, fixed_abs, tag = 'smem constant byte address 0x4 - core index']
  #allocation1 [shape = 'u32[144,128]{1,0:T(1,128)}', space=vmem, size = 0x12000, scoped, tag = 'internal scratch']
  %s0 = inlined_call_operand.hbm [shape: f32[9,768], index: 0, kind: input, shape index: {}]
  %s1 = inlined_call_operand.hbm [shape: f32[2,8,11], index: 1, kind: input, shape index: {}]
  %s2 = inlined_call_operand.hbm [shape: f32[2,4,768], index: 2, kind: output, shape index: {0}]
  %s3 = inlined_call_operand.hbm [shape: f32[2,1,768], index: 3, kind: output, shape index: {1}]
  %4 = xla_tuple %s2, %s3
  %s5 = sld [smem:[#allocation0]]
  $region57: #{tpu_custom_call.1} parent=0
    _
  %s7 = ssub.s32 1, %s5
  %s8 = scalar_select 0, %s7, %s5
  $region1: #{tpu_custom_call.1} parent=0
    #allocation2 [shape = 'u8[49152]{0}', space=vmem, size = 0xc000, scoped, tag = 'input window, operand 0, single buffered']
    #allocation3 [shape = 's32[2]{0}', space=sflag, size = 0x8, scoped, tag = 'scoped memory for tpu_custom_call.1']
    #allocation4 [shape = 's32[2]{0}', space=sflag, size = 0x8, scoped, tag = 'scoped memory for tpu_custom_call.1']
    #allocation5 [shape = 'u8[8192]{0}', space=vmem, size = 0x2000, scoped, tag = 'input window, operand 1']
    #allocation6 [shape = 's32[2]{0}', space=sflag, size = 0x8, scoped, tag = 'scoped memory for tpu_custom_call.1']
    #allocation7 [shape = 'u8[24576]{0}', space=vmem, size = 0x6000, scoped, tag = 'output window, operand 0']
    #allocation8 [shape = 'u8[6144]{0}', space=vmem, size = 0x1800, scoped, tag = 'output window, operand 1']
    #allocation9 [shape = 's32[2]{0}', space=sflag, size = 0x8, scoped, tag = 'scoped memory for tpu_custom_call.1']
    %9 = vsyncpa [#allocation3], 0
    %10 = vsyncpa [#allocation6], 0
    %s11 = scalar_lea.sflag [#allocation6], 1
    %12 = vsyncpa %s11, 0
    %13 = vsyncpa [#allocation4], 0
    %s14 = scalar_lea.sflag [#allocation4], 1
    %15 = vsyncpa %s14, 0
    %16 = vsyncpa [#allocation9], 0
    %s17 = scalar_lea.sflag [#allocation9], 1
    %18 = vsyncpa %s17, 0
    loop: start=0, step=1, limit=4
    $region2: #{tpu_custom_call.1} parent=1 // loop_pre_header
      _
    $region3: #{tpu_custom_call.1} parent=1 // loop_header
      %s20 = sphi 0, %s24
      %p21 = scmp.ge.s32.totalorder %s20, 4
      %s28 = sphi 0, %s28
      %s30 = sphi 0, %s28
      %s31 = sphi 0, %s30
      %s45 = sphi 0, %s31
      %s51 = sphi 0, %s53
      %s54 = sphi 0, %s51
      %s55 = sphi 0, %s54
      %s71 = sphi 0, %s55
      %s77 = sphi 0, %s79
      %s80 = sphi 0, %s77
      %s81 = sphi 0, %s80
      %s97 = sphi 0, %s81
      %s103 = sphi 0, %s105
      %s106 = sphi 0, %s103
      %s107 = sphi 0, %s106
      %s123 = sphi 0, %s107
    $region4: #{tpu_custom_call.1} parent=1 // loop_header_branch
      %23 = sbr.rel (%p21) target = $region8
    $region5: #{tpu_custom_call.1} parent=1 // loop_body
      %s25 = ssub.s32 %s20, 1
      %s26 = ssub.s32 %s20, 2
      %s27 = sadd.s32 %s20, 1
      %s29 = sadd.s32 %s28, 1
      %p32 = scmp.eq.s32.totalorder %s20, 1
      %p33 = scmp.ne.s32.totalorder %s28, %s30
      %p34 = scmp.eq.s32.totalorder %s20, 0
      %p35 = por %p33, %p34
      %p36 = scmp.ne.s32.totalorder %s28, %s30
      %p37 = scmp.eq.s32.totalorder %s25, 1
      %p38 = por %p36, %p37
      %p39 = scmp.ne.s32.totalorder %s30, %s31
      %p40 = scmp.eq.s32.totalorder %s25, 0
      %p41 = por %p39, %p40
      %p42 = scmp.ne.s32.totalorder %s30, %s31
      %p43 = scmp.eq.s32.totalorder %s26, 1
      %p44 = por %p42, %p43
      %p46 = scmp.ne.s32.totalorder %s31, %s45
      %p47 = scmp.eq.s32.totalorder %s26, 0
      %p48 = por %p46, %p47
      %s49 = ssub.s32 %s20, %s27
      %p50 = scmp.eq.s32.totalorder %s49, 0
      %s52 = sadd.s32 %s51, 1
      %s53 = scalar_select %p50, %s51, %s52
      %p56 = pneg %p50
      %p57 = scmp.eq.s32.totalorder %s20, 1
      %p58 = por %p56, %p57
      %p59 = scmp.ne.s32.totalorder %s51, %s54
      %p60 = scmp.eq.s32.totalorder %s20, 0
      %p61 = por %p59, %p60
      %p62 = scmp.ne.s32.totalorder %s51, %s54
      %p63 = scmp.eq.s32.totalorder %s25, 1
      %p64 = por %p62, %p63
      %p65 = scmp.ne.s32.totalorder %s54, %s55
      %p66 = scmp.eq.s32.totalorder %s25, 0
      %p67 = por %p65, %p66
      %p68 = scmp.ne.s32.totalorder %s54, %s55
      %p69 = scmp.eq.s32.totalorder %s26, 1
      %p70 = por %p68, %p69
      %p72 = scmp.ne.s32.totalorder %s55, %s71
      %p73 = scmp.eq.s32.totalorder %s26, 0
      %p74 = por %p72, %p73
      %s75 = ssub.s32 %s20, %s27
      %p76 = scmp.eq.s32.totalorder %s75, 0
      %s78 = sadd.s32 %s77, 1
      %s79 = scalar_select %p76, %s77, %s78
      %p82 = pneg %p76
      %p83 = scmp.eq.s32.totalorder %s20, 1
      %p84 = por %p82, %p83
      %p85 = scmp.ne.s32.totalorder %s77, %s80
      %p86 = scmp.eq.s32.totalorder %s20, 0
      %p87 = por %p85, %p86
      %p88 = scmp.ne.s32.totalorder %s77, %s80
      %p89 = scmp.eq.s32.totalorder %s25, 1
      %p90 = por %p88, %p89
      %p91 = scmp.ne.s32.totalorder %s80, %s81
      %p92 = scmp.eq.s32.totalorder %s25, 0
      %p93 = por %p91, %p92
      %p94 = scmp.ne.s32.totalorder %s80, %s81
      %p95 = scmp.eq.s32.totalorder %s26, 1
      %p96 = por %p94, %p95
      %p98 = scmp.ne.s32.totalorder %s81, %s97
      %p99 = scmp.eq.s32.totalorder %s26, 0
      %p100 = por %p98, %p99
      %s101 = ssub.s32 %s20, %s27
      %p102 = scmp.eq.s32.totalorder %s101, 0
      %s104 = sadd.s32 %s103, 1
      %s105 = scalar_select %p102, %s103, %s104
      %p108 = pneg %p102
      %p109 = scmp.eq.s32.totalorder %s20, 1
      %p110 = por %p108, %p109
      %p111 = scmp.ne.s32.totalorder %s103, %s106
      %p112 = scmp.eq.s32.totalorder %s20, 0
      %p113 = por %p111, %p112
      %p114 = scmp.ne.s32.totalorder %s103, %s106
      %p115 = scmp.eq.s32.totalorder %s25, 1
      %p116 = por %p114, %p115
      %p117 = scmp.ne.s32.totalorder %s106, %s107
      %p118 = scmp.eq.s32.totalorder %s25, 0
      %p119 = por %p117, %p118
      %p120 = scmp.ne.s32.totalorder %s106, %s107
      %p121 = scmp.eq.s32.totalorder %s26, 1
      %p122 = por %p120, %p121
      %p124 = scmp.ne.s32.totalorder %s107, %s123
      %p125 = scmp.eq.s32.totalorder %s26, 0
      %p126 = por %p124, %p125
      %p127 = scmp.le.s32.totalorder 1, %s20
      %p128 = scmp.lt.s32.totalorder %s20, 3
      %p129 = pnand %p127, %p128
      %p130 = pneg %p129
      // Predicated region
      $region9: #{tpu_custom_call.1} parent=5 // pred_check
        _
      $region10: #{tpu_custom_call.1} parent=5 // pred_check_branch
        %132 = sbr.rel (%p129) target = $region12
      $region11: #{tpu_custom_call.1} parent=5 // pred_region
        %s133 = ssub.s32 %s20, 1
        // Predicated region
        $region13: #{tpu_custom_call.1} parent=11 // pred_check
          %p134 = pneg %p41
        $region14: #{tpu_custom_call.1} parent=11 // pred_check_branch
          %136 = sbr.rel (%p134) target = $region16
        $region15: #{tpu_custom_call.1} parent=11 // pred_region
          %s138 = ssub.s32 1536, 1536
          %139 = vsyncadd [#allocation3], %s138
          %s140 = sshll.u32 [#allocation2], 4
          %s141 = int_to_ptr.vmem [resolvable:$true] %s140
          %146 = dma.hbm_to_vmem [thread:$0]  %s0, 1536, %s141, [#allocation3], 768, 768, 48
        $region16: #{tpu_custom_call.1} parent=11 // pred_fallthru
          _
      $region12: #{tpu_custom_call.1} parent=5 // pred_fallthru
        _
      %p147 = scmp.lt.s32.totalorder %s20, 2
      // Predicated region
      $region17: #{tpu_custom_call.1} parent=5 // pred_check
        %p148 = pneg %p147
      $region18: #{tpu_custom_call.1} parent=5 // pred_check_branch
        %150 = sbr.rel (%p148) target = $region20
      $region19: #{tpu_custom_call.1} parent=5 // pred_region
        // Predicated region
        $region21: #{tpu_custom_call.1} parent=19 // pred_check
          %p151 = pneg %p61
        $region22: #{tpu_custom_call.1} parent=19 // pred_check_branch
          %153 = sbr.rel (%p151) target = $region24
        $region23: #{tpu_custom_call.1} parent=19 // pred_region
          %s154 = sand.u32 %s51, 1
          %s155 = scalar_lea.sflag [#allocation6], %s154
          %s156 = sand.u32 %s51, 1
          %s157 = smul.addr %s156, 8
          %s158 = scalar_lea.vmem [#allocation5], %s157
          %s160 = ssub.s32 128, 128
          %161 = vsyncadd %s155, %s160
          %s162 = smul.addr %s20, 128
          %s163 = scalar_lea.hbm %s1, %s162
          %s165 = sshll.u32 %s158, 4
          %s166 = int_to_ptr.vmem [resolvable:$true] %s165
          %168 = dma.hbm_to_vmem [thread:$0]  %s163, 128, %s166, %s155
        $region24: #{tpu_custom_call.1} parent=19 // pred_fallthru
          _
      $region20: #{tpu_custom_call.1} parent=5 // pred_fallthru
        _
      %p169 = scmp.le.s32.totalorder 1, %s20
      %p170 = scmp.lt.s32.totalorder %s20, 3
      %p171 = pnand %p169, %p170
      %p172 = pneg %p171
      // Predicated region
      $region25: #{tpu_custom_call.1} parent=5 // pred_check
        _
      $region26: #{tpu_custom_call.1} parent=5 // pred_check_branch
        %174 = sbr.rel (%p171) target = $region28
      $region27: #{tpu_custom_call.1} parent=5 // pred_region
        %s175 = ssub.s32 %s20, 1
        // Predicated region
        $region29: #{tpu_custom_call.1} parent=27 // pred_check
          %p176 = pneg %p41
        $region30: #{tpu_custom_call.1} parent=27 // pred_check_branch
          %178 = sbr.rel (%p176) target = $region32
        $region31: #{tpu_custom_call.1} parent=27 // pred_region
          %179 = dma.done [#allocation3], 1536
        $region32: #{tpu_custom_call.1} parent=27 // pred_fallthru
          _
        %s180 = sand.u32 %s54, 1
        %s181 = scalar_lea.sflag [#allocation6], %s180
        %s182 = sand.u32 %s54, 1
        %s183 = smul.addr %s182, 8
        %s184 = scalar_lea.vmem [#allocation5], %s183
        // Predicated region
        $region33: #{tpu_custom_call.1} parent=27 // pred_check
          %p185 = pneg %p67
        $region34: #{tpu_custom_call.1} parent=27 // pred_check_branch
          %187 = sbr.rel (%p185) target = $region36
        $region35: #{tpu_custom_call.1} parent=27 // pred_region
          %188 = dma.done %s181, 128
        $region36: #{tpu_custom_call.1} parent=27 // pred_fallthru
          _
        %p189 = pneg %p41
        %p190 = pneg %p38
        %s191 = sand.u32 %s54, 1
        %s192 = scalar_lea.sflag [#allocation6], %s191
        %s193 = sand.u32 %s54, 1
        %s194 = smul.addr %s193, 8
        %s195 = scalar_lea.vmem [#allocation5], %s194
        %p196 = pneg %p67
        %p197 = pneg %p64
        %p198 = pneg %p93
        %p199 = pneg %p90
        %s200 = sand.u32 %s80, 1
        %s201 = scalar_lea.sflag [#allocation4], %s200
        %s202 = sand.u32 %s80, 1
        %s203 = smul.addr %s202, 24
        %s204 = scalar_lea.vmem [#allocation7], %s203
        %p205 = pneg %p119
        %p206 = pneg %p116
        %s207 = sand.u32 %s106, 1
        %s208 = scalar_lea.sflag [#allocation9], %s207
        %s209 = sand.u32 %s106, 1
        %s210 = smul.addr %s209, 6
        %s211 = scalar_lea.vmem [#allocation8], %s210
        %v212 = vld [vmem:[#allocation2] sm:$0xff]
        %v213 = vld [vmem:[#allocation2 + $0x8] sm:$0xff]
        %v214 = vld [vmem:[#allocation2 + $0x10] sm:$0xff]
        %v215 = vld [vmem:[#allocation2 + $0x18] sm:$0xff]
        %v216 = vld [vmem:[#allocation2 + $0x20] sm:$0xff]
        %v217 = vld [vmem:[#allocation2 + $0x28] sm:$0xff]
        %v218 = vld [vmem:[#allocation2 + $0x30] sm:$0x1]
        %v219 = vld [vmem:[#allocation2 + $0x38] sm:$0x1]
        %v220 = vld [vmem:[#allocation2 + $0x40] sm:$0x1]
        %v221 = vld [vmem:[#allocation2 + $0x48] sm:$0x1]
        %v222 = vld [vmem:[#allocation2 + $0x50] sm:$0x1]
        %v223 = vld [vmem:[#allocation2 + $0x58] sm:$0x1]
        %v224 = vld [vmem:[%s184] sm:$0xff]
        %v225 = vlaneseq
        %v226 = vshrl.u32 %v225, 7
        %v227 = vsub.s32 6, %v226
        %v228 = vrot.slane %v212, %v227
        %v229 = vlaneseq
        %v230 = vshrl.u32 %v229, 7
        %v231 = vsub.s32 6, %v230
        %v232 = vrot.slane %v213, %v231
        %v233 = vlaneseq
        %v234 = vshrl.u32 %v233, 7
        %v235 = vsub.s32 6, %v234
        %v236 = vrot.slane %v214, %v235
        %v237 = vlaneseq
        %v238 = vshrl.u32 %v237, 7
        %v239 = vsub.s32 6, %v238
        %v240 = vrot.slane %v215, %v239
        %v241 = vlaneseq
        %v242 = vshrl.u32 %v241, 7
        %v243 = vsub.s32 6, %v242
        %v244 = vrot.slane %v216, %v243
        %v245 = vlaneseq
        %v246 = vshrl.u32 %v245, 7
        %v247 = vsub.s32 6, %v246
        %v248 = vrot.slane %v217, %v247
        %250 = vset.pattern.permute.xlu0 6
        %251 = vperm.xlu0 %250, %v224
        %v252 = vpop.permute.xlu0 %251
        %v254 = vmin.f32 %v228, %v252
        %v255 = vmin.f32 %v232, %v252
        %v256 = vmin.f32 %v236, %v252
        %v257 = vmin.f32 %v240, %v252
        %v258 = vmin.f32 %v244, %v252
        %v259 = vmin.f32 %v248, %v252
        %v260 = vlaneseq
        %v261 = vshrl.u32 %v260, 7
        %v262 = vsub.s32 4, %v261
        %v263 = vrot.slane %v212, %v262
        %v264 = vlaneseq
        %v265 = vshrl.u32 %v264, 7
        %v266 = vsub.s32 4, %v265
        %v267 = vrot.slane %v213, %v266
        %v268 = vlaneseq
        %v269 = vshrl.u32 %v268, 7
        %v270 = vsub.s32 4, %v269
        %v271 = vrot.slane %v214, %v270
        %v272 = vlaneseq
        %v273 = vshrl.u32 %v272, 7
        %v274 = vsub.s32 4, %v273
        %v275 = vrot.slane %v215, %v274
        %v276 = vlaneseq
        %v277 = vshrl.u32 %v276, 7
        %v278 = vsub.s32 4, %v277
        %v279 = vrot.slane %v216, %v278
        %v280 = vlaneseq
        %v281 = vshrl.u32 %v280, 7
        %v282 = vsub.s32 4, %v281
        %v283 = vrot.slane %v217, %v282
        %284 = vset.pattern.permute.xlu0 4
        %285 = vperm.xlu0 %284, %v224
        %v286 = vpop.permute.xlu0 %285
        %v288 = vmax.f32 %v263, %v286
        %v289 = vmax.f32 %v267, %v286
        %v290 = vmax.f32 %v271, %v286
        %v291 = vmax.f32 %v275, %v286
        %v292 = vmax.f32 %v279, %v286
        %v293 = vmax.f32 %v283, %v286
        %v294 = vsub.f32 %v254, %v288
        %v295 = vsub.f32 %v255, %v289
        %v296 = vsub.f32 %v256, %v290
        %v297 = vsub.f32 %v257, %v291
        %v298 = vsub.f32 %v258, %v292
        %v299 = vsub.f32 %v259, %v293
        %v300 = vadd.f32 %v294, 1.0
        %v301 = vadd.f32 %v295, 1.0
        %v302 = vadd.f32 %v296, 1.0
        %v303 = vadd.f32 %v297, 1.0
        %v304 = vadd.f32 %v298, 1.0
        %v305 = vadd.f32 %v299, 1.0
        %v306 = vmax.f32 %v300, 0.0
        %v307 = vmax.f32 %v301, 0.0
        %v308 = vmax.f32 %v302, 0.0
        %v309 = vmax.f32 %v303, 0.0
        %v310 = vmax.f32 %v304, 0.0
        %v311 = vmax.f32 %v305, 0.0
        %v312 = vlaneseq
        %v313 = vshrl.u32 %v312, 7
        %v314 = vsub.s32 7, %v313
        %v315 = vrot.slane %v212, %v314
        %v316 = vlaneseq
        %v317 = vshrl.u32 %v316, 7
        %v318 = vsub.s32 7, %v317
        %v319 = vrot.slane %v213, %v318
        %v320 = vlaneseq
        %v321 = vshrl.u32 %v320, 7
        %v322 = vsub.s32 7, %v321
        %v323 = vrot.slane %v214, %v322
        %v324 = vlaneseq
        %v325 = vshrl.u32 %v324, 7
        %v326 = vsub.s32 7, %v325
        %v327 = vrot.slane %v215, %v326
        %v328 = vlaneseq
        %v329 = vshrl.u32 %v328, 7
        %v330 = vsub.s32 7, %v329
        %v331 = vrot.slane %v216, %v330
        %v332 = vlaneseq
        %v333 = vshrl.u32 %v332, 7
        %v334 = vsub.s32 7, %v333
        %v335 = vrot.slane %v217, %v334
        %336 = vset.pattern.permute.xlu0 7
        %337 = vperm.xlu0 %336, %v224
        %v338 = vpop.permute.xlu0 %337
        %v340 = vmin.f32 %v315, %v338
        %v341 = vmin.f32 %v319, %v338
        %v342 = vmin.f32 %v323, %v338
        %v343 = vmin.f32 %v327, %v338
        %v344 = vmin.f32 %v331, %v338
        %v345 = vmin.f32 %v335, %v338
        %v346 = vlaneseq
        %v347 = vshrl.u32 %v346, 7
        %v348 = vsub.s32 5, %v347
        %v349 = vrot.slane %v212, %v348
        %v350 = vlaneseq
        %v351 = vshrl.u32 %v350, 7
        %v352 = vsub.s32 5, %v351
        %v353 = vrot.slane %v213, %v352
        %v354 = vlaneseq
        %v355 = vshrl.u32 %v354, 7
        %v356 = vsub.s32 5, %v355
        %v357 = vrot.slane %v214, %v356
        %v358 = vlaneseq
        %v359 = vshrl.u32 %v358, 7
        %v360 = vsub.s32 5, %v359
        %v361 = vrot.slane %v215, %v360
        %v362 = vlaneseq
        %v363 = vshrl.u32 %v362, 7
        %v364 = vsub.s32 5, %v363
        %v365 = vrot.slane %v216, %v364
        %v366 = vlaneseq
        %v367 = vshrl.u32 %v366, 7
        %v368 = vsub.s32 5, %v367
        %v369 = vrot.slane %v217, %v368
        %370 = vset.pattern.permute.xlu0 5
        %371 = vperm.xlu0 %370, %v224
        %v372 = vpop.permute.xlu0 %371
        %v374 = vmax.f32 %v349, %v372
        %v375 = vmax.f32 %v353, %v372
        %v376 = vmax.f32 %v357, %v372
        %v377 = vmax.f32 %v361, %v372
        %v378 = vmax.f32 %v365, %v372
        %v379 = vmax.f32 %v369, %v372
        %v380 = vsub.f32 %v340, %v374
        %v381 = vsub.f32 %v341, %v375
        %v382 = vsub.f32 %v342, %v376
        %v383 = vsub.f32 %v343, %v377
        %v384 = vsub.f32 %v344, %v378
        %v385 = vsub.f32 %v345, %v379
        %v386 = vadd.f32 %v380, 1.0
        %v387 = vadd.f32 %v381, 1.0
        %v388 = vadd.f32 %v382, 1.0
        %v389 = vadd.f32 %v383, 1.0
        %v390 = vadd.f32 %v384, 1.0
        %v391 = vadd.f32 %v385, 1.0
        %v392 = vmax.f32 %v386, 0.0
        %v393 = vmax.f32 %v387, 0.0
        %v394 = vmax.f32 %v388, 0.0
        %v395 = vmax.f32 %v389, 0.0
        %v396 = vmax.f32 %v390, 0.0
        %v397 = vmax.f32 %v391, 0.0
        %v398 = vmul.f32 %v306, %v392
        %v399 = vmul.f32 %v307, %v393
        %v400 = vmul.f32 %v308, %v394
        %v401 = vmul.f32 %v309, %v395
        %v402 = vmul.f32 %v310, %v396
        %v403 = vmul.f32 %v311, %v397
        %v404 = vlaneseq
        %v405 = vshrl.u32 %v404, 7
        %v406 = vsub.s32 0, %v405
        %v407 = vrot.slane %v218, %v406
        %v408 = vlaneseq
        %v409 = vshrl.u32 %v408, 7
        %v410 = vsub.s32 0, %v409
        %v411 = vrot.slane %v219, %v410
        %v412 = vlaneseq
        %v413 = vshrl.u32 %v412, 7
        %v414 = vsub.s32 0, %v413
        %v415 = vrot.slane %v220, %v414
        %v416 = vlaneseq
        %v417 = vshrl.u32 %v416, 7
        %v418 = vsub.s32 0, %v417
        %v419 = vrot.slane %v221, %v418
        %v420 = vlaneseq
        %v421 = vshrl.u32 %v420, 7
        %v422 = vsub.s32 0, %v421
        %v423 = vrot.slane %v222, %v422
        %v424 = vlaneseq
        %v425 = vshrl.u32 %v424, 7
        %v426 = vsub.s32 0, %v425
        %v427 = vrot.slane %v223, %v426
        %428 = vset.pattern.permute.xlu0 8
        %429 = vperm.xlu0 %428, %v224
        %v430 = vpop.permute.xlu0 %429
        %v432 = vadd.f32 %v407, %v430
        %v433 = vadd.f32 %v411, %v430
        %v434 = vadd.f32 %v415, %v430
        %v435 = vadd.f32 %v419, %v430
        %v436 = vadd.f32 %v423, %v430
        %v437 = vadd.f32 %v427, %v430
        %v438 = vsub.f32 %v432, %v398
        %v439 = vsub.f32 %v433, %v399
        %v440 = vsub.f32 %v434, %v400
        %v441 = vsub.f32 %v435, %v401
        %v442 = vsub.f32 %v436, %v402
        %v443 = vsub.f32 %v437, %v403
        %v444 = vrcp.pop %v438
        %v445 = vmul.f32 %v398, %v444
        %v446 = vrcp.pop %v439
        %v447 = vmul.f32 %v399, %v446
        %v448 = vrcp.pop %v440
        %v449 = vmul.f32 %v400, %v448
        %v450 = vrcp.pop %v441
        %v451 = vmul.f32 %v401, %v450
        %v452 = vrcp.pop %v442
        %v453 = vmul.f32 %v402, %v452
        %v454 = vrcp.pop %v443
        %v455 = vmul.f32 %v403, %v454
        %v456 = vlaneseq
        %v457 = vand.u32 %v456, 127
        %v458 = vadd.s32 %v457, 128
        %v459 = vadd.s32 %v457, 256
        %v460 = vadd.s32 %v457, 384
        %v461 = vadd.s32 %v457, 512
        %v462 = vadd.s32 %v457, 640
        %v463 = vlaneseq
        %v464 = vshrl.u32 %v463, 7
        %vm465 = vcmp.lt.s32.totalorder %v457, 765
        %vm466 = vcmp.lt.s32.totalorder %v458, 765
        %vm467 = vcmp.lt.s32.totalorder %v459, 765
        %vm468 = vcmp.lt.s32.totalorder %v460, 765
        %vm469 = vcmp.lt.s32.totalorder %v461, 765
        %vm470 = vcmp.lt.s32.totalorder %v462, 765
        %v471 = vsel %vm465, %v445, -1.0
        %v472 = vsel %vm466, %v447, -1.0
        %v473 = vsel %vm467, %v449, -1.0
        %v474 = vsel %vm468, %v451, -1.0
        %v475 = vsel %vm469, %v453, -1.0
        %v476 = vsel %vm470, %v455, -1.0
        %v477 = vrot.slane %v471, 4
        %v478 = vmax.f32 %v471, %v477
        %v479 = vrot.slane %v478, 2
        %v480 = vmax.f32 %v478, %v479
        %v481 = vrot.slane %v480, 1
        %v482 = vmax.f32 %v480, %v481
        %v483 = vrot.slane %v472, 4
        %v484 = vmax.f32 %v472, %v483
        %v485 = vrot.slane %v484, 2
        %v486 = vmax.f32 %v484, %v485
        %v487 = vrot.slane %v486, 1
        %v488 = vmax.f32 %v486, %v487
        %v489 = vrot.slane %v473, 4
        %v490 = vmax.f32 %v473, %v489
        %v491 = vrot.slane %v490, 2
        %v492 = vmax.f32 %v490, %v491
        %v493 = vrot.slane %v492, 1
        %v494 = vmax.f32 %v492, %v493
        %v495 = vrot.slane %v474, 4
        %v496 = vmax.f32 %v474, %v495
        %v497 = vrot.slane %v496, 2
        %v498 = vmax.f32 %v496, %v497
        %v499 = vrot.slane %v498, 1
        %v500 = vmax.f32 %v498, %v499
        %v501 = vrot.slane %v475, 4
        %v502 = vmax.f32 %v475, %v501
        %v503 = vrot.slane %v502, 2
        %v504 = vmax.f32 %v502, %v503
        %v505 = vrot.slane %v504, 1
        %v506 = vmax.f32 %v504, %v505
        %v507 = vrot.slane %v476, 4
        %v508 = vmax.f32 %v476, %v507
        %v509 = vrot.slane %v508, 2
        %v510 = vmax.f32 %v508, %v509
        %v511 = vrot.slane %v510, 1
        %v512 = vmax.f32 %v510, %v511
        %vm513 = vcmp.eq.f32.partialorder %v471, %v482
        %vm514 = vcmp.eq.f32.partialorder %v472, %v488
        %vm515 = vcmp.eq.f32.partialorder %v473, %v494
        %vm516 = vcmp.eq.f32.partialorder %v474, %v500
        %vm517 = vcmp.eq.f32.partialorder %v475, %v506
        %vm518 = vcmp.eq.f32.partialorder %v476, %v512
        %v519 = vsel %vm513, %v464, 8
        %v520 = vsel %vm514, %v464, 8
        %v521 = vsel %vm515, %v464, 8
        %v522 = vsel %vm516, %v464, 8
        %v523 = vsel %vm517, %v464, 8
        %v524 = vsel %vm518, %v464, 8
        %v525 = vrot.slane %v519, 4
        %vm526 = vcmp.lt.s32.totalorder %v519, %v525
        %v527 = vsel %vm526, %v519, %v525
        %v528 = vrot.slane %v527, 2
        %vm529 = vcmp.lt.s32.totalorder %v527, %v528
        %v530 = vsel %vm529, %v527, %v528
        %v531 = vrot.slane %v530, 1
        %vm532 = vcmp.lt.s32.totalorder %v530, %v531
        %v533 = vsel %vm532, %v530, %v531
        %v534 = vrot.slane %v520, 4
        %vm535 = vcmp.lt.s32.totalorder %v520, %v534
        %v536 = vsel %vm535, %v520, %v534
        %v537 = vrot.slane %v536, 2
        %vm538 = vcmp.lt.s32.totalorder %v536, %v537
        %v539 = vsel %vm538, %v536, %v537
        %v540 = vrot.slane %v539, 1
        %vm541 = vcmp.lt.s32.totalorder %v539, %v540
        %v542 = vsel %vm541, %v539, %v540
        %v543 = vrot.slane %v521, 4
        %vm544 = vcmp.lt.s32.totalorder %v521, %v543
        %v545 = vsel %vm544, %v521, %v543
        %v546 = vrot.slane %v545, 2
        %vm547 = vcmp.lt.s32.totalorder %v545, %v546
        %v548 = vsel %vm547, %v545, %v546
        %v549 = vrot.slane %v548, 1
        %vm550 = vcmp.lt.s32.totalorder %v548, %v549
        %v551 = vsel %vm550, %v548, %v549
        %v552 = vrot.slane %v522, 4
        %vm553 = vcmp.lt.s32.totalorder %v522, %v552
        %v554 = vsel %vm553, %v522, %v552
        %v555 = vrot.slane %v554, 2
        %vm556 = vcmp.lt.s32.totalorder %v554, %v555
        %v557 = vsel %vm556, %v554, %v555
        %v558 = vrot.slane %v557, 1
        %vm559 = vcmp.lt.s32.totalorder %v557, %v558
        %v560 = vsel %vm559, %v557, %v558
        %v561 = vrot.slane %v523, 4
        %vm562 = vcmp.lt.s32.totalorder %v523, %v561
        %v563 = vsel %vm562, %v523, %v561
        %v564 = vrot.slane %v563, 2
        %vm565 = vcmp.lt.s32.totalorder %v563, %v564
        %v566 = vsel %vm565, %v563, %v564
        %v567 = vrot.slane %v566, 1
        %vm568 = vcmp.lt.s32.totalorder %v566, %v567
        %v569 = vsel %vm568, %v566, %v567
        %v570 = vrot.slane %v524, 4
        %vm571 = vcmp.lt.s32.totalorder %v524, %v570
        %v572 = vsel %vm571, %v524, %v570
        %v573 = vrot.slane %v572, 2
        %vm574 = vcmp.lt.s32.totalorder %v572, %v573
        %v575 = vsel %vm574, %v572, %v573
        %v576 = vrot.slane %v575, 1
        %vm577 = vcmp.lt.s32.totalorder %v575, %v576
        %v578 = vsel %vm577, %v575, %v576
        %v579 = vmax.f32 %v471, %v475
        %v580 = vmax.f32 %v472, %v476
        %v581 = vmax.f32 %v579, %v580
        %v582 = vmax.f32 %v473, %v474
        %v583 = vmax.f32 %v581, %v582
        %584 = vmax.xlane.f32.xlu0 %v583
        %v585 = vpop.xlane.xlu0 %584
        %vm586 = vcmp.eq.f32.partialorder %v471, %v585
        %vm587 = vcmp.eq.f32.partialorder %v472, %v585
        %vm588 = vcmp.eq.f32.partialorder %v473, %v585
        %vm589 = vcmp.eq.f32.partialorder %v474, %v585
        %vm590 = vcmp.eq.f32.partialorder %v475, %v585
        %vm591 = vcmp.eq.f32.partialorder %v476, %v585
        %v592 = vsel %vm586, %v457, 768
        %v593 = vsel %vm587, %v458, 768
        %v594 = vsel %vm588, %v459, 768
        %v595 = vsel %vm589, %v460, 768
        %v596 = vsel %vm590, %v461, 768
        %v597 = vsel %vm591, %v462, 768
        %vm598 = vcmp.lt.s32.totalorder %v592, %v596
        %v599 = vsel %vm598, %v592, %v596
        %vm600 = vcmp.lt.s32.totalorder %v593, %v597
        %v601 = vsel %vm600, %v593, %v597
        %vm602 = vcmp.lt.s32.totalorder %v599, %v601
        %v603 = vsel %vm602, %v599, %v601
        %vm604 = vcmp.lt.s32.totalorder %v594, %v595
        %v605 = vsel %vm604, %v594, %v595
        %vm606 = vcmp.lt.s32.totalorder %v603, %v605
        %v607 = vsel %vm606, %v603, %v605
        %v608 = vand.u32 %v607, 65535
        %v609 = vshra.s32 %v607, 16
        %v610 = vcvt.s32.f32 %v608
        %v611 = vcvt.s32.f32 %v609
        %612 = vmin.xlane.f32.xlu0 %v611
        %v613 = vpop.xlane.xlu0 %612
        %vm614 = vcmp.eq.f32.partialorder %v611, %v613
        %v615 = vsel %vm614, %v610, inf
        %616 = vmin.xlane.f32.xlu0 %v615
        %v617 = vpop.xlane.xlu0 %616
        %v618 = vcvt.f32.s32 %v617
        %v619 = vcvt.f32.s32 %v613
        %v620 = vshll.u32 %v619, 16
        %v621 = vadd.s32 %v620, %v618
        %v622 = vcvt.f32.s32.to.zero.pseudo %v224
        %vm623 = vcmp.eq.s32.totalorder %v457, %v621
        %vm624 = vcmp.eq.s32.totalorder %v458, %v621
        %vm625 = vcmp.eq.s32.totalorder %v459, %v621
        %vm626 = vcmp.eq.s32.totalorder %v460, %v621
        %vm627 = vcmp.eq.s32.totalorder %v461, %v621
        %vm628 = vcmp.eq.s32.totalorder %v462, %v621
        %629 = vset.pattern.permute.xlu0 10
        %630 = vperm.xlu0 %629, %v622
        %v631 = vpop.permute.xlu0 %630
        %vm632 = vcmp.lt.s32.totalorder %v464, %v631
        %vm633 = vmand %vm623, %vm632
        %vm634 = vmand %vm624, %vm632
        %vm635 = vmand %vm625, %vm632
        %vm636 = vmand %vm626, %vm632
        %vm637 = vmand %vm627, %vm632
        %vm638 = vmand %vm628, %vm632
        %v639 = vsel %vm633, %v464, 4294967295
        %v640 = vsel %vm634, %v464, 4294967295
        %v641 = vsel %vm635, %v464, 4294967295
        %v642 = vsel %vm636, %v464, 4294967295
        %v643 = vsel %vm637, %v464, 4294967295
        %v644 = vsel %vm638, %v464, 4294967295
        %v645 = vrot.slane %v639, 4
        %vm646 = vcmp.gt.s32.totalorder %v639, %v645
        %v647 = vsel %vm646, %v639, %v645
        %v648 = vrot.slane %v647, 2
        %vm649 = vcmp.gt.s32.totalorder %v647, %v648
        %v650 = vsel %vm649, %v647, %v648
        %v651 = vrot.slane %v650, 1
        %vm652 = vcmp.gt.s32.totalorder %v650, %v651
        %v653 = vsel %vm652, %v650, %v651
        %v654 = vrot.slane %v640, 4
        %vm655 = vcmp.gt.s32.totalorder %v640, %v654
        %v656 = vsel %vm655, %v640, %v654
        %v657 = vrot.slane %v656, 2
        %vm658 = vcmp.gt.s32.totalorder %v656, %v657
        %v659 = vsel %vm658, %v656, %v657
        %v660 = vrot.slane %v659, 1
        %vm661 = vcmp.gt.s32.totalorder %v659, %v660
        %v662 = vsel %vm661, %v659, %v660
        %v663 = vrot.slane %v641, 4
        %vm664 = vcmp.gt.s32.totalorder %v641, %v663
        %v665 = vsel %vm664, %v641, %v663
        %v666 = vrot.slane %v665, 2
        %vm667 = vcmp.gt.s32.totalorder %v665, %v666
        %v668 = vsel %vm667, %v665, %v666
        %v669 = vrot.slane %v668, 1
        %vm670 = vcmp.gt.s32.totalorder %v668, %v669
        %v671 = vsel %vm670, %v668, %v669
        %v672 = vrot.slane %v642, 4
        %vm673 = vcmp.gt.s32.totalorder %v642, %v672
        %v674 = vsel %vm673, %v642, %v672
        %v675 = vrot.slane %v674, 2
        %vm676 = vcmp.gt.s32.totalorder %v674, %v675
        %v677 = vsel %vm676, %v674, %v675
        %v678 = vrot.slane %v677, 1
        %vm679 = vcmp.gt.s32.totalorder %v677, %v678
        %v680 = vsel %vm679, %v677, %v678
        %v681 = vrot.slane %v643, 4
        %vm682 = vcmp.gt.s32.totalorder %v643, %v681
        %v683 = vsel %vm682, %v643, %v681
        %v684 = vrot.slane %v683, 2
        %vm685 = vcmp.gt.s32.totalorder %v683, %v684
        %v686 = vsel %vm685, %v683, %v684
        %v687 = vrot.slane %v686, 1
        %vm688 = vcmp.gt.s32.totalorder %v686, %v687
        %v689 = vsel %vm688, %v686, %v687
        %v690 = vrot.slane %v644, 4
        %vm691 = vcmp.gt.s32.totalorder %v644, %v690
        %v692 = vsel %vm691, %v644, %v690
        %v693 = vrot.slane %v692, 2
        %vm694 = vcmp.gt.s32.totalorder %v692, %v693
        %v695 = vsel %vm694, %v692, %v693
        %v696 = vrot.slane %v695, 1
        %vm697 = vcmp.gt.s32.totalorder %v695, %v696
        %v698 = vsel %vm697, %v695, %v696
        %vm699 = vcmp.ge.s32.totalorder %v653, 0
        %vm700 = vcmp.ge.s32.totalorder %v662, 0
        %vm701 = vcmp.ge.s32.totalorder %v671, 0
        %vm702 = vcmp.ge.s32.totalorder %v680, 0
        %vm703 = vcmp.ge.s32.totalorder %v689, 0
        %vm704 = vcmp.ge.s32.totalorder %v698, 0
        %v705 = vsel %vm699, %v653, %v533
        %v706 = vsel %vm700, %v662, %v542
        %v707 = vsel %vm701, %v671, %v551
        %v708 = vsel %vm702, %v680, %v560
        %v709 = vsel %vm703, %v689, %v569
        %v710 = vsel %vm704, %v698, %v578
        %v711 = vsel %vm699, 1.0, %v482
        %v712 = vsel %vm700, 1.0, %v488
        %v713 = vsel %vm701, 1.0, %v494
        %v714 = vsel %vm702, 1.0, %v500
        %v715 = vsel %vm703, 1.0, %v506
        %v716 = vsel %vm704, 1.0, %v512
        %vm717 = vcmp.eq.s32.totalorder %v464, %v705
        %vm718 = vcmp.eq.s32.totalorder %v464, %v706
        %vm719 = vcmp.eq.s32.totalorder %v464, %v707
        %vm720 = vcmp.eq.s32.totalorder %v464, %v708
        %vm721 = vcmp.eq.s32.totalorder %v464, %v709
        %vm722 = vcmp.eq.s32.totalorder %v464, %v710
        %723 = vset.pattern.permute.xlu0 0
        %724 = vperm.xlu0 %723, %v224
        %v725 = vpop.permute.xlu0 %724
        %v727 = vsel %vm717, %v725, 0.0
        %v728 = vsel %vm718, %v725, 0.0
        %v729 = vsel %vm719, %v725, 0.0
        %v730 = vsel %vm720, %v725, 0.0
        %v731 = vsel %vm721, %v725, 0.0
        %v732 = vsel %vm722, %v725, 0.0
        %v733 = vrot.slane %v727, 4
        %v734 = vadd.f32 %v727, %v733
        %v735 = vrot.slane %v734, 2
        %v736 = vadd.f32 %v734, %v735
        %v737 = vrot.slane %v736, 1
        %v738 = vadd.f32 %v736, %v737
        %v739 = vrot.slane %v728, 4
        %v740 = vadd.f32 %v728, %v739
        %v741 = vrot.slane %v740, 2
        %v742 = vadd.f32 %v740, %v741
        %v743 = vrot.slane %v742, 1
        %v744 = vadd.f32 %v742, %v743
        %v745 = vrot.slane %v729, 4
        %v746 = vadd.f32 %v729, %v745
        %v747 = vrot.slane %v746, 2
        %v748 = vadd.f32 %v746, %v747
        %v749 = vrot.slane %v748, 1
        %v750 = vadd.f32 %v748, %v749
        %v751 = vrot.slane %v730, 4
        %v752 = vadd.f32 %v730, %v751
        %v753 = vrot.slane %v752, 2
        %v754 = vadd.f32 %v752, %v753
        %v755 = vrot.slane %v754, 1
        %v756 = vadd.f32 %v754, %v755
        %v757 = vrot.slane %v731, 4
        %v758 = vadd.f32 %v731, %v757
        %v759 = vrot.slane %v758, 2
        %v760 = vadd.f32 %v758, %v759
        %v761 = vrot.slane %v760, 1
        %v762 = vadd.f32 %v760, %v761
        %v763 = vrot.slane %v732, 4
        %v764 = vadd.f32 %v732, %v763
        %v765 = vrot.slane %v764, 2
        %v766 = vadd.f32 %v764, %v765
        %v767 = vrot.slane %v766, 1
        %v768 = vadd.f32 %v766, %v767
        %769 = vset.pattern.permute.xlu0 1
        %770 = vperm.xlu0 %769, %v224
        %v771 = vpop.permute.xlu0 %770
        %v773 = vsel %vm717, %v771, 0.0
        %v774 = vsel %vm718, %v771, 0.0
        %v775 = vsel %vm719, %v771, 0.0
        %v776 = vsel %vm720, %v771, 0.0
        %v777 = vsel %vm721, %v771, 0.0
        %v778 = vsel %vm722, %v771, 0.0
        %v779 = vrot.slane %v773, 4
        %v780 = vadd.f32 %v773, %v779
        %v781 = vrot.slane %v780, 2
        %v782 = vadd.f32 %v780, %v781
        %v783 = vrot.slane %v782, 1
        %v784 = vadd.f32 %v782, %v783
        %v785 = vrot.slane %v774, 4
        %v786 = vadd.f32 %v774, %v785
        %v787 = vrot.slane %v786, 2
        %v788 = vadd.f32 %v786, %v787
        %v789 = vrot.slane %v788, 1
        %v790 = vadd.f32 %v788, %v789
        %v791 = vrot.slane %v775, 4
        %v792 = vadd.f32 %v775, %v791
        %v793 = vrot.slane %v792, 2
        %v794 = vadd.f32 %v792, %v793
        %v795 = vrot.slane %v794, 1
        %v796 = vadd.f32 %v794, %v795
        %v797 = vrot.slane %v776, 4
        %v798 = vadd.f32 %v776, %v797
        %v799 = vrot.slane %v798, 2
        %v800 = vadd.f32 %v798, %v799
        %v801 = vrot.slane %v800, 1
        %v802 = vadd.f32 %v800, %v801
        %v803 = vrot.slane %v777, 4
        %v804 = vadd.f32 %v777, %v803
        %v805 = vrot.slane %v804, 2
        %v806 = vadd.f32 %v804, %v805
        %v807 = vrot.slane %v806, 1
        %v808 = vadd.f32 %v806, %v807
        %v809 = vrot.slane %v778, 4
        %v810 = vadd.f32 %v778, %v809
        %v811 = vrot.slane %v810, 2
        %v812 = vadd.f32 %v810, %v811
        %v813 = vrot.slane %v812, 1
        %v814 = vadd.f32 %v812, %v813
        %815 = vset.pattern.permute.xlu0 2
        %816 = vperm.xlu0 %815, %v224
        %v817 = vpop.permute.xlu0 %816
        %v819 = vsel %vm717, %v817, 0.0
        %v820 = vsel %vm718, %v817, 0.0
        %v821 = vsel %vm719, %v817, 0.0
        %v822 = vsel %vm720, %v817, 0.0
        %v823 = vsel %vm721, %v817, 0.0
        %v824 = vsel %vm722, %v817, 0.0
        %v825 = vrot.slane %v819, 4
        %v826 = vadd.f32 %v819, %v825
        %v827 = vrot.slane %v826, 2
        %v828 = vadd.f32 %v826, %v827
        %v829 = vrot.slane %v828, 1
        %v830 = vadd.f32 %v828, %v829
        %v831 = vrot.slane %v820, 4
        %v832 = vadd.f32 %v820, %v831
        %v833 = vrot.slane %v832, 2
        %v834 = vadd.f32 %v832, %v833
        %v835 = vrot.slane %v834, 1
        %v836 = vadd.f32 %v834, %v835
        %v837 = vrot.slane %v821, 4
        %v838 = vadd.f32 %v821, %v837
        %v839 = vrot.slane %v838, 2
        %v840 = vadd.f32 %v838, %v839
        %v841 = vrot.slane %v840, 1
        %v842 = vadd.f32 %v840, %v841
        %v843 = vrot.slane %v822, 4
        %v844 = vadd.f32 %v822, %v843
        %v845 = vrot.slane %v844, 2
        %v846 = vadd.f32 %v844, %v845
        %v847 = vrot.slane %v846, 1
        %v848 = vadd.f32 %v846, %v847
        %v849 = vrot.slane %v823, 4
        %v850 = vadd.f32 %v823, %v849
        %v851 = vrot.slane %v850, 2
        %v852 = vadd.f32 %v850, %v851
        %v853 = vrot.slane %v852, 1
        %v854 = vadd.f32 %v852, %v853
        %v855 = vrot.slane %v824, 4
        %v856 = vadd.f32 %v824, %v855
        %v857 = vrot.slane %v856, 2
        %v858 = vadd.f32 %v856, %v857
        %v859 = vrot.slane %v858, 1
        %v860 = vadd.f32 %v858, %v859
        %861 = vset.pattern.permute.xlu0 3
        %862 = vperm.xlu0 %861, %v224
        %v863 = vpop.permute.xlu0 %862
        %v865 = vsel %vm717, %v863, 0.0
        %v866 = vsel %vm718, %v863, 0.0
        %v867 = vsel %vm719, %v863, 0.0
        %v868 = vsel %vm720, %v863, 0.0
        %v869 = vsel %vm721, %v863, 0.0
        %v870 = vsel %vm722, %v863, 0.0
        %v871 = vrot.slane %v865, 4
        %v872 = vadd.f32 %v865, %v871
        %v873 = vrot.slane %v872, 2
        %v874 = vadd.f32 %v872, %v873
        %v875 = vrot.slane %v874, 1
        %v876 = vadd.f32 %v874, %v875
        %v877 = vrot.slane %v866, 4
        %v878 = vadd.f32 %v866, %v877
        %v879 = vrot.slane %v878, 2
        %v880 = vadd.f32 %v878, %v879
        %v881 = vrot.slane %v880, 1
        %v882 = vadd.f32 %v880, %v881
        %v883 = vrot.slane %v867, 4
        %v884 = vadd.f32 %v867, %v883
        %v885 = vrot.slane %v884, 2
        %v886 = vadd.f32 %v884, %v885
        %v887 = vrot.slane %v886, 1
        %v888 = vadd.f32 %v886, %v887
        %v889 = vrot.slane %v868, 4
        %v890 = vadd.f32 %v868, %v889
        %v891 = vrot.slane %v890, 2
        %v892 = vadd.f32 %v890, %v891
        %v893 = vrot.slane %v892, 1
        %v894 = vadd.f32 %v892, %v893
        %v895 = vrot.slane %v869, 4
        %v896 = vadd.f32 %v869, %v895
        %v897 = vrot.slane %v896, 2
        %v898 = vadd.f32 %v896, %v897
        %v899 = vrot.slane %v898, 1
        %v900 = vadd.f32 %v898, %v899
        %v901 = vrot.slane %v870, 4
        %v902 = vadd.f32 %v870, %v901
        %v903 = vrot.slane %v902, 2
        %v904 = vadd.f32 %v902, %v903
        %v905 = vrot.slane %v904, 1
        %v906 = vadd.f32 %v904, %v905
        %907 = vset.pattern.permute.xlu0 9
        %908 = vperm.xlu0 %907, %v224
        %v909 = vpop.permute.xlu0 %908
        %v911 = vsel %vm717, %v909, 0.0
        %v912 = vsel %vm718, %v909, 0.0
        %v913 = vsel %vm719, %v909, 0.0
        %v914 = vsel %vm720, %v909, 0.0
        %v915 = vsel %vm721, %v909, 0.0
        %v916 = vsel %vm722, %v909, 0.0
        %v917 = vrot.slane %v911, 4
        %v918 = vadd.f32 %v911, %v917
        %v919 = vrot.slane %v918, 2
        %v920 = vadd.f32 %v918, %v919
        %v921 = vrot.slane %v920, 1
        %v922 = vadd.f32 %v920, %v921
        %v923 = vrot.slane %v912, 4
        %v924 = vadd.f32 %v912, %v923
        %v925 = vrot.slane %v924, 2
        %v926 = vadd.f32 %v924, %v925
        %v927 = vrot.slane %v926, 1
        %v928 = vadd.f32 %v926, %v927
        %v929 = vrot.slane %v913, 4
        %v930 = vadd.f32 %v913, %v929
        %v931 = vrot.slane %v930, 2
        %v932 = vadd.f32 %v930, %v931
        %v933 = vrot.slane %v932, 1
        %v934 = vadd.f32 %v932, %v933
        %v935 = vrot.slane %v914, 4
        %v936 = vadd.f32 %v914, %v935
        %v937 = vrot.slane %v936, 2
        %v938 = vadd.f32 %v936, %v937
        %v939 = vrot.slane %v938, 1
        %v940 = vadd.f32 %v938, %v939
        %v941 = vrot.slane %v915, 4
        %v942 = vadd.f32 %v915, %v941
        %v943 = vrot.slane %v942, 2
        %v944 = vadd.f32 %v942, %v943
        %v945 = vrot.slane %v944, 1
        %v946 = vadd.f32 %v944, %v945
        %v947 = vrot.slane %v916, 4
        %v948 = vadd.f32 %v916, %v947
        %v949 = vrot.slane %v948, 2
        %v950 = vadd.f32 %v948, %v949
        %v951 = vrot.slane %v950, 1
        %v952 = vadd.f32 %v950, %v951
        %v953 = vsub.f32 %v738, %v212
        %v954 = vsub.f32 %v744, %v213
        %v955 = vsub.f32 %v750, %v214
        %v956 = vsub.f32 %v756, %v215
        %v957 = vsub.f32 %v762, %v216
        %v958 = vsub.f32 %v768, %v217
        %v965 = vrot.slane %v212, 2
        %v966 = vrot.slane %v213, 2
        %v967 = vrot.slane %v214, 2
        %v968 = vrot.slane %v215, 2
        %v969 = vrot.slane %v216, 2
        %v970 = vrot.slane %v217, 2
        %v977 = vmul.f32 %v953, %v965
        %v978 = vmul.f32 %v954, %v966
        %v979 = vmul.f32 %v955, %v967
        %v980 = vmul.f32 %v956, %v968
        %v981 = vmul.f32 %v957, %v969
        %v982 = vmul.f32 %v958, %v970
        %v989 = vcombine.low %v977, %v978
        %v990 = vcombine.low %v979, %v980
        %v991 = vcombine.low %v981, %v982
        %v993 = vunpack.c.l.s4 1966171168
        %v994 = vunpack.c.0.s8 %v993
        %v995 = vlaneseq
        %v996 = vshrl.u32 %v995, 7
        %v997 = vsub.s32 %v994, %v996
        %v998 = vrot.slane %v989, %v997
        %v1000 = vunpack.c.l.s4 1966171168
        %v1001 = vunpack.c.0.s8 %v1000
        %v1002 = vlaneseq
        %v1003 = vshrl.u32 %v1002, 7
        %v1004 = vsub.s32 %v1001, %v1003
        %v1005 = vrot.slane %v990, %v1004
        %v1007 = vunpack.c.l.s4 1966171168
        %v1008 = vunpack.c.0.s8 %v1007
        %v1009 = vlaneseq
        %v1010 = vshrl.u32 %v1009, 7
        %v1011 = vsub.s32 %v1008, %v1010
        %v1012 = vrot.slane %v991, %v1011
        %v1013 = vcombine.low %v998, %v1005
        %v1015 = vunpack.c.l.s4 1966171168
        %v1016 = vunpack.c.0.s8 %v1015
        %v1017 = vlaneseq
        %v1018 = vshrl.u32 %v1017, 7
        %v1019 = vsub.s32 %v1016, %v1018
        %v1020 = vrot.slane %v1013, %v1019
        %v1022 = vunpack.c.l.s4 1966171168
        %v1023 = vunpack.c.0.s8 %v1022
        %v1024 = vlaneseq
        %v1025 = vshrl.u32 %v1024, 7
        %v1026 = vsub.s32 %v1023, %v1025
        %v1027 = vrot.slane %v1012, %v1026
        %v1028 = vcombine.low %v1020, %v1027
        %v1030 = vlaneseq
        %vm1031 = vcmp.ge.s32.totalorder %v1030, 0
        %vm1032 = vcmp.lt.s32.totalorder %v1030, 768
        %vm1033 = vmand %vm1031, %vm1032
        %1034 = vst.msk [vmem:[%s204] ss:$4 sm:$0x3f] %vm1033, %v1028
        %v1035 = vsub.f32 %v784, %v212
        %v1036 = vsub.f32 %v790, %v213
        %v1037 = vsub.f32 %v796, %v214
        %v1038 = vsub.f32 %v802, %v215
        %v1039 = vsub.f32 %v808, %v216
        %v1040 = vsub.f32 %v814, %v217
        %v1041 = vmul.f32 %v1035, %v965
        %v1042 = vmul.f32 %v1036, %v966
        %v1043 = vmul.f32 %v1037, %v967
        %v1044 = vmul.f32 %v1038, %v968
        %v1045 = vmul.f32 %v1039, %v969
        %v1046 = vmul.f32 %v1040, %v970
        %v1053 = vcombine.low %v1041, %v1042
        %v1054 = vcombine.low %v1043, %v1044
        %v1055 = vcombine.low %v1045, %v1046
        %v1057 = vunpack.c.l.s4 1966171168
        %v1058 = vunpack.c.0.s8 %v1057
        %v1059 = vlaneseq
        %v1060 = vshrl.u32 %v1059, 7
        %v1061 = vsub.s32 %v1058, %v1060
        %v1062 = vrot.slane %v1053, %v1061
        %v1064 = vunpack.c.l.s4 1966171168
        %v1065 = vunpack.c.0.s8 %v1064
        %v1066 = vlaneseq
        %v1067 = vshrl.u32 %v1066, 7
        %v1068 = vsub.s32 %v1065, %v1067
        %v1069 = vrot.slane %v1054, %v1068
        %v1071 = vunpack.c.l.s4 1966171168
        %v1072 = vunpack.c.0.s8 %v1071
        %v1073 = vlaneseq
        %v1074 = vshrl.u32 %v1073, 7
        %v1075 = vsub.s32 %v1072, %v1074
        %v1076 = vrot.slane %v1055, %v1075
        %v1077 = vcombine.high %v1062, %v1069
        %v1078 = vcombine.high %v1076, %v1076
        %v1080 = vunpack.c.l.s4 1966171168
        %v1081 = vunpack.c.0.s8 %v1080
        %v1082 = vlaneseq
        %v1083 = vshrl.u32 %v1082, 7
        %v1084 = vsub.s32 %v1081, %v1083
        %v1085 = vrot.slane %v1077, %v1084
        %v1087 = vunpack.c.l.s4 1966171168
        %v1088 = vunpack.c.0.s8 %v1087
        %v1089 = vlaneseq
        %v1090 = vshrl.u32 %v1089, 7
        %v1091 = vsub.s32 %v1088, %v1090
        %v1092 = vrot.slane %v1078, %v1091
        %v1093 = vcombine.low %v1085, %v1092
        %s1095 = scalar_lea.vmem %s204, 1 [#allocation7]
        %1096 = vst.msk [vmem:[%s1095] ss:$4 sm:$0x3f] %vm1033, %v1093
        %v1097 = vmul.f32 %v830, %v212
        %v1098 = vmul.f32 %v836, %v213
        %v1099 = vmul.f32 %v842, %v214
        %v1100 = vmul.f32 %v848, %v215
        %v1101 = vmul.f32 %v854, %v216
        %v1102 = vmul.f32 %v860, %v217
        %v1103 = vlog2.pop %v1097
        %v1104 = vmul.f32 %v1103, 0.6931472
        %v1105 = vlog2.pop %v1098
        %v1106 = vmul.f32 %v1105, 0.6931472
        %v1107 = vlog2.pop %v1099
        %v1108 = vmul.f32 %v1107, 0.6931472
        %v1109 = vlog2.pop %v1100
        %v1110 = vmul.f32 %v1109, 0.6931472
        %v1111 = vlog2.pop %v1101
        %v1112 = vmul.f32 %v1111, 0.6931472
        %v1113 = vlog2.pop %v1102
        %v1114 = vmul.f32 %v1113, 0.6931472
        %v1121 = vcombine.low %v1104, %v1106
        %v1122 = vcombine.low %v1108, %v1110
        %v1123 = vcombine.low %v1112, %v1114
        %v1125 = vunpack.c.l.s4 1966171168
        %v1126 = vunpack.c.0.s8 %v1125
        %v1127 = vlaneseq
        %v1128 = vshrl.u32 %v1127, 7
        %v1129 = vsub.s32 %v1126, %v1128
        %v1130 = vrot.slane %v1121, %v1129
        %v1132 = vunpack.c.l.s4 1966171168
        %v1133 = vunpack.c.0.s8 %v1132
        %v1134 = vlaneseq
        %v1135 = vshrl.u32 %v1134, 7
        %v1136 = vsub.s32 %v1133, %v1135
        %v1137 = vrot.slane %v1122, %v1136
        %v1139 = vunpack.c.l.s4 1966171168
        %v1140 = vunpack.c.0.s8 %v1139
        %v1141 = vlaneseq
        %v1142 = vshrl.u32 %v1141, 7
        %v1143 = vsub.s32 %v1140, %v1142
        %v1144 = vrot.slane %v1123, %v1143
        %v1145 = vcombine.low %v1130, %v1137
        %v1147 = vunpack.c.l.s4 1966171168
        %v1148 = vunpack.c.0.s8 %v1147
        %v1149 = vlaneseq
        %v1150 = vshrl.u32 %v1149, 7
        %v1151 = vsub.s32 %v1148, %v1150
        %v1152 = vrot.slane %v1145, %v1151
        %v1154 = vunpack.c.l.s4 1966171168
        %v1155 = vunpack.c.0.s8 %v1154
        %v1156 = vlaneseq
        %v1157 = vshrl.u32 %v1156, 7
        %v1158 = vsub.s32 %v1155, %v1157
        %v1159 = vrot.slane %v1144, %v1158
        %v1160 = vcombine.high %v1152, %v1159
        %s1162 = scalar_lea.vmem %s204, 2 [#allocation7]
        %1163 = vst.msk [vmem:[%s1162] ss:$4 sm:$0x3f] %vm1033, %v1160
        %v1164 = vmul.f32 %v876, %v212
        %v1165 = vmul.f32 %v882, %v213
        %v1166 = vmul.f32 %v888, %v214
        %v1167 = vmul.f32 %v894, %v215
        %v1168 = vmul.f32 %v900, %v216
        %v1169 = vmul.f32 %v906, %v217
        %v1170 = vlog2.pop %v1164
        %v1171 = vmul.f32 %v1170, 0.6931472
        %v1172 = vlog2.pop %v1165
        %v1173 = vmul.f32 %v1172, 0.6931472
        %v1174 = vlog2.pop %v1166
        %v1175 = vmul.f32 %v1174, 0.6931472
        %v1176 = vlog2.pop %v1167
        %v1177 = vmul.f32 %v1176, 0.6931472
        %v1178 = vlog2.pop %v1168
        %v1179 = vmul.f32 %v1178, 0.6931472
        %v1180 = vlog2.pop %v1169
        %v1181 = vmul.f32 %v1180, 0.6931472
        %v1188 = vcombine.low %v1171, %v1173
        %v1189 = vcombine.low %v1175, %v1177
        %v1190 = vcombine.low %v1179, %v1181
        %v1192 = vunpack.c.l.s4 1966171168
        %v1193 = vunpack.c.0.s8 %v1192
        %v1194 = vlaneseq
        %v1195 = vshrl.u32 %v1194, 7
        %v1196 = vsub.s32 %v1193, %v1195
        %v1197 = vrot.slane %v1188, %v1196
        %v1199 = vunpack.c.l.s4 1966171168
        %v1200 = vunpack.c.0.s8 %v1199
        %v1201 = vlaneseq
        %v1202 = vshrl.u32 %v1201, 7
        %v1203 = vsub.s32 %v1200, %v1202
        %v1204 = vrot.slane %v1189, %v1203
        %v1206 = vunpack.c.l.s4 1966171168
        %v1207 = vunpack.c.0.s8 %v1206
        %v1208 = vlaneseq
        %v1209 = vshrl.u32 %v1208, 7
        %v1210 = vsub.s32 %v1207, %v1209
        %v1211 = vrot.slane %v1190, %v1210
        %v1212 = vcombine.high %v1197, %v1204
        %v1213 = vcombine.high %v1211, %v1211
        %v1215 = vunpack.c.l.s4 1966171168
        %v1216 = vunpack.c.0.s8 %v1215
        %v1217 = vlaneseq
        %v1218 = vshrl.u32 %v1217, 7
        %v1219 = vsub.s32 %v1216, %v1218
        %v1220 = vrot.slane %v1212, %v1219
        %v1222 = vunpack.c.l.s4 1966171168
        %v1223 = vunpack.c.0.s8 %v1222
        %v1224 = vlaneseq
        %v1225 = vshrl.u32 %v1224, 7
        %v1226 = vsub.s32 %v1223, %v1225
        %v1227 = vrot.slane %v1213, %v1226
        %v1228 = vcombine.high %v1220, %v1227
        %s1230 = scalar_lea.vmem %s204, 3 [#allocation7]
        %1231 = vst.msk [vmem:[%s1230] ss:$4 sm:$0x3f] %vm1033, %v1228
        %vm1232 = vcmp.lt.f32.partialorder %v711, 0.5
        %vm1233 = vcmp.lt.f32.partialorder %v712, 0.5
        %vm1234 = vcmp.lt.f32.partialorder %v713, 0.5
        %vm1235 = vcmp.lt.f32.partialorder %v714, 0.5
        %vm1236 = vcmp.lt.f32.partialorder %v715, 0.5
        %vm1237 = vcmp.lt.f32.partialorder %v716, 0.5
        %v1238 = vsel %vm1232, 0.0, %v922
        %v1239 = vsel %vm1233, 0.0, %v928
        %v1240 = vsel %vm1234, 0.0, %v934
        %v1241 = vsel %vm1235, 0.0, %v940
        %v1242 = vsel %vm1236, 0.0, %v946
        %v1243 = vsel %vm1237, 0.0, %v952
        %vm1244 = vcmp.gt.f32.partialorder %v711, 0.4
        %vm1245 = vcmp.gt.f32.partialorder %v712, 0.4
        %vm1246 = vcmp.gt.f32.partialorder %v713, 0.4
        %vm1247 = vcmp.gt.f32.partialorder %v714, 0.4
        %vm1248 = vcmp.gt.f32.partialorder %v715, 0.4
        %vm1249 = vcmp.gt.f32.partialorder %v716, 0.4
        %vm1250 = vmand %vm1244, %vm1232
        %vm1251 = vmand %vm1245, %vm1233
        %vm1252 = vmand %vm1246, %vm1234
        %vm1253 = vmand %vm1247, %vm1235
        %vm1254 = vmand %vm1248, %vm1236
        %vm1255 = vmand %vm1249, %vm1237
        %v1256 = vsel %vm1250, -1.0, %v1238
        %v1257 = vsel %vm1251, -1.0, %v1239
        %v1258 = vsel %vm1252, -1.0, %v1240
        %v1259 = vsel %vm1253, -1.0, %v1241
        %v1260 = vsel %vm1254, -1.0, %v1242
        %v1261 = vsel %vm1255, -1.0, %v1243
        %v1268 = vcombine.low %v1256, %v1257
        %v1269 = vcombine.low %v1258, %v1259
        %v1270 = vcombine.low %v1260, %v1261
        %v1272 = vunpack.c.l.s4 1966171168
        %v1273 = vunpack.c.0.s8 %v1272
        %v1274 = vlaneseq
        %v1275 = vshrl.u32 %v1274, 7
        %v1276 = vsub.s32 %v1273, %v1275
        %v1277 = vrot.slane %v1268, %v1276
        %v1279 = vunpack.c.l.s4 1966171168
        %v1280 = vunpack.c.0.s8 %v1279
        %v1281 = vlaneseq
        %v1282 = vshrl.u32 %v1281, 7
        %v1283 = vsub.s32 %v1280, %v1282
        %v1284 = vrot.slane %v1269, %v1283
        %v1286 = vunpack.c.l.s4 1966171168
        %v1287 = vunpack.c.0.s8 %v1286
        %v1288 = vlaneseq
        %v1289 = vshrl.u32 %v1288, 7
        %v1290 = vsub.s32 %v1287, %v1289
        %v1291 = vrot.slane %v1270, %v1290
        %v1292 = vcombine.low %v1277, %v1284
        %v1294 = vunpack.c.l.s4 1966171168
        %v1295 = vunpack.c.0.s8 %v1294
        %v1296 = vlaneseq
        %v1297 = vshrl.u32 %v1296, 7
        %v1298 = vsub.s32 %v1295, %v1297
        %v1299 = vrot.slane %v1292, %v1298
        %v1301 = vunpack.c.l.s4 1966171168
        %v1302 = vunpack.c.0.s8 %v1301
        %v1303 = vlaneseq
        %v1304 = vshrl.u32 %v1303, 7
        %v1305 = vsub.s32 %v1302, %v1304
        %v1306 = vrot.slane %v1291, %v1305
        %v1307 = vcombine.low %v1299, %v1306
        %1309 = vst.msk [vmem:[%s211] sm:$0x3f] %vm1033, %v1307
        %s1310 = sand.u32 %s80, 1
        %s1311 = scalar_lea.sflag [#allocation4], %s1310
        %s1312 = sand.u32 %s80, 1
        %s1313 = smul.addr %s1312, 24
        %s1314 = scalar_lea.vmem [#allocation7], %s1313
        %s1315 = sand.u32 %s106, 1
        %s1316 = scalar_lea.sflag [#allocation9], %s1315
        %s1317 = sand.u32 %s106, 1
        %s1318 = smul.addr %s1317, 6
        %s1319 = scalar_lea.vmem [#allocation8], %s1318
        // Predicated region
        $region37: #{tpu_custom_call.1} parent=27 // pred_check
          %p1320 = pneg %p90
        $region38: #{tpu_custom_call.1} parent=27 // pred_check_branch
          %1322 = sbr.rel (%p1320) target = $region40
        $region39: #{tpu_custom_call.1} parent=27 // pred_region
          %s1324 = ssub.s32 384, 384
          %1325 = vsyncadd %s1311, %s1324
          %s1326 = smul.addr %s25, 6
          %s1327 = smul.addr %s1326, 64
          %s1328 = scalar_lea.hbm %s2, %s1327
          %s1330 = sshll.u32 %s1314, 4
          %s1331 = int_to_ptr.vmem [resolvable:$true] %s1330
          %1333 = dma.vmem_to_hbm [thread:$0]  %s1331, 384, %s1328, %s1311
        $region40: #{tpu_custom_call.1} parent=27 // pred_fallthru
          _
        // Predicated region
        $region41: #{tpu_custom_call.1} parent=27 // pred_check
          %p1334 = pneg %p116
        $region42: #{tpu_custom_call.1} parent=27 // pred_check_branch
          %1336 = sbr.rel (%p1334) target = $region44
        $region43: #{tpu_custom_call.1} parent=27 // pred_region
          %s1338 = ssub.s32 96, 96
          %1339 = vsyncadd %s1316, %s1338
          %s1340 = smul.addr %s25, 6
          %s1341 = smul.addr %s1340, 16
          %s1342 = scalar_lea.hbm %s3, %s1341
          %s1344 = sshll.u32 %s1319, 4
          %s1345 = int_to_ptr.vmem [resolvable:$true] %s1344
          %1347 = dma.vmem_to_hbm [thread:$0]  %s1345, 96, %s1342, %s1316
        $region44: #{tpu_custom_call.1} parent=27 // pred_fallthru
          _
      $region28: #{tpu_custom_call.1} parent=5 // pred_fallthru
        _
      %p1348 = scmp.le.s32.totalorder 2, %s20
      // Predicated region
      $region45: #{tpu_custom_call.1} parent=5 // pred_check
        %p1349 = pneg %p1348
      $region46: #{tpu_custom_call.1} parent=5 // pred_check_branch
        %1351 = sbr.rel (%p1349) target = $region48
      $region47: #{tpu_custom_call.1} parent=5 // pred_region
        %s1352 = ssub.s32 %s20, 2
        // Predicated region
        $region49: #{tpu_custom_call.1} parent=47 // pred_check
          %p1353 = pneg %p96
        $region50: #{tpu_custom_call.1} parent=47 // pred_check_branch
          %1355 = sbr.rel (%p1353) target = $region52
        $region51: #{tpu_custom_call.1} parent=47 // pred_region
          %s1356 = sand.u32 %s81, 1
          %s1357 = scalar_lea.sflag [#allocation4], %s1356
          %s1358 = sand.u32 %s81, 1
          %s1359 = smul.addr %s1358, 24
          %s1360 = scalar_lea.vmem [#allocation7], %s1359
          %1361 = dma.done %s1357, 384
        $region52: #{tpu_custom_call.1} parent=47 // pred_fallthru
          _
        // Predicated region
        $region53: #{tpu_custom_call.1} parent=47 // pred_check
          %p1362 = pneg %p122
        $region54: #{tpu_custom_call.1} parent=47 // pred_check_branch
          %1364 = sbr.rel (%p1362) target = $region56
        $region55: #{tpu_custom_call.1} parent=47 // pred_region
          %s1365 = sand.u32 %s107, 1
          %s1366 = scalar_lea.sflag [#allocation9], %s1365
          %s1367 = sand.u32 %s107, 1
          %s1368 = smul.addr %s1367, 6
          %s1369 = scalar_lea.vmem [#allocation8], %s1368
          %1370 = dma.done %s1366, 96
        $region56: #{tpu_custom_call.1} parent=47 // pred_fallthru
          _
      $region48: #{tpu_custom_call.1} parent=5 // pred_fallthru
        _
    $region6: #{tpu_custom_call.1} parent=1 // loop_footer
      %s24 = sadd.s32 1, %s20
    $region7: #{tpu_custom_call.1} parent=1 // loop_footer_branch
      %19 = sbr.rel target = $region3
    $region8: #{tpu_custom_call.1} parent=1 // loop_exit
      _
    %1371 = vsyncpa [#allocation3], 1
    %s1372 = scalar_lea.sflag [#allocation3], 1
    %1373 = vsyncpa %s1372, 1
    %1374 = vsyncpa [#allocation6], 1
    %s1375 = scalar_lea.sflag [#allocation6], 1
    %1376 = vsyncpa %s1375, 1
    %1377 = vsyncpa [#allocation4], 1
    %s1378 = scalar_lea.sflag [#allocation4], 1
    %1379 = vsyncpa %s1378, 1
    %1380 = vsyncpa [#allocation9], 1
    %s1381 = scalar_lea.sflag [#allocation9], 1
    %1382 = vsyncpa %s1381, 1

</llo_original>
